<compile_context>
chip_gen: v5e
topology: v5e:2x2
jax: 0.10.0
libtpu: 0.0.40
codegen_flags: <defaults>
</compile_context>

<pallas_src>
import functools

import jax
import jax.numpy as jnp
from jax import lax
from jax.experimental import pallas as pl
from jax.experimental.pallas import tpu as pltpu

CIN = 3                      # input channels (per-slice images)
COUT = 64                    # self.dim = 64 (backbone output channels)
KW = 3                       # 3x3 conv stem
KTAPS = KW * KW * CIN        # 27
KTAPS_B = KTAPS + 1          # +1 constant-one column folds the conv bias into the matmul
KPAD = 32                    # im2col contraction dim padded 28 -> 32
EPS = 1e-5                   # nn.LayerNorm default eps

# Packed-parameter row layout: a single (8, COUT) f32 operand.
ROW_NORM_G, ROW_NORM_B, ROW_SFC_W, ROW_MLP_G, ROW_MLP_B, ROW_MLP_W, ROW_SCALARS = range(7)
# ROW_SCALARS: lane 0 = sfc bias, lane 1 = mlp_head bias


def _layernorm(x, g, b):
    mu = jnp.mean(x, axis=-1, keepdims=True)
    var = jnp.mean(jnp.square(x - mu), axis=-1, keepdims=True)
    return (x - mu) * lax.rsqrt(var + EPS) * g + b


def _fused_kernel(p_ref, cw_ref, par_ref, o_ref, feats_ref, *, HW, SPS):
    step = pl.program_id(0)

    # ---- feature stem for this tile of SPS slices: bf16 im2col matmul (f32 acc) + ReLU ----------
    conv = jnp.dot(p_ref[...], cw_ref[...], preferred_element_type=jnp.float32)  # (SPS*HW, COUT)
    conv = jnp.maximum(conv, 0.0)                       # bias already folded into the matmul
    # AdaptiveMaxPool2d(1): global spatial max per slice.
    tile_feat = jnp.max(conv.reshape(SPS, HW, COUT), axis=1)                     # (SPS, COUT)

    row0 = step * SPS
    if SPS % 8 == 0:
        row0 = pl.multiple_of(row0, 8)
    feats_ref[pl.ds(row0, SPS), :] = tile_feat

    # ---- "transformer" head: once, on the full (S, COUT) feature matrix ------------------------
    @pl.when(step == pl.num_programs(0) - 1)
    def _():
        x = feats_ref[...]                                                       # (S, COUT) f32
        g1 = par_ref[ROW_NORM_G:ROW_NORM_G + 1, :]
        b1 = par_ref[ROW_NORM_B:ROW_NORM_B + 1, :]
        sw = par_ref[ROW_SFC_W:ROW_SFC_W + 1, :]
        g2 = par_ref[ROW_MLP_G:ROW_MLP_G + 1, :]
        b2 = par_ref[ROW_MLP_B:ROW_MLP_B + 1, :]
        mw = par_ref[ROW_MLP_W:ROW_MLP_W + 1, :]
        sb = par_ref[ROW_SCALARS:ROW_SCALARS + 1, 0:1]                           # (1, 1)
        mb = par_ref[ROW_SCALARS:ROW_SCALARS + 1, 1:2]                           # (1, 1)

        xn = _layernorm(x, g1, b1)
        # self.sfc = Linear(64, 1): broadcast-multiply + lane reduce on the VPU.
        xd = jnp.sum(xn * sw, axis=-1, keepdims=True) + sb                       # (S, 1)

        # w = softmax(0.5 * xd @ xd^T, dim=-1)  — (S,1) outer product with itself.
        wl = lax.dot_general(xd, xd, (((1,), (1,)), ((), ())),
                             preferred_element_type=jnp.float32) * 0.5           # (S, S)
        wl = jnp.exp(wl - jnp.max(wl, axis=-1, keepdims=True))
        attn = wl / jnp.sum(wl, axis=-1, keepdims=True)

        # z = x + w @ x ; z = z.max(dim=0)[0]
        z = x + jnp.dot(attn, x, preferred_element_type=jnp.float32)             # (S, COUT)
        z = jnp.max(z, axis=0, keepdims=True)                                    # (1, COUT)

        # Dropout(p=0.5): eval-mode identity.
        # mlp_head = LayerNorm(64) -> Linear(64, 1); then Sigmoid.
        zn = _layernorm(z, g2, b2)
        logit = jnp.sum(zn * mw, axis=-1, keepdims=True) + mb                    # (1, 1)
        o_ref[...] = jax.nn.sigmoid(logit)


def _pack_params(params):
    """Pack the nine tiny head/bias parameters into one (8, COUT) f32 block (one DMA)."""
    p = jnp.zeros((8, COUT), jnp.float32)
    p = p.at[ROW_NORM_G].set(params["norm_g"].reshape(COUT))
    p = p.at[ROW_NORM_B].set(params["norm_b"].reshape(COUT))
    p = p.at[ROW_SFC_W].set(params["sfc_w"].reshape(COUT))
    p = p.at[ROW_MLP_G].set(params["mlp_g"].reshape(COUT))
    p = p.at[ROW_MLP_B].set(params["mlp_b"].reshape(COUT))
    p = p.at[ROW_MLP_W].set(params["mlp_w"].reshape(COUT))
    p = p.at[ROW_SCALARS, 0].set(params["sfc_b"].reshape(()))
    p = p.at[ROW_SCALARS, 1].set(params["mlp_b2"].reshape(()))
    return p


def simple_trans_forward(batch, conv_w, conv_b, params):
    """batch: (S, CIN, H, W) NCHW -> (1,) sigmoid output (matches torch's shape-(1,) result)."""
    S, C, H, W = batch.shape
    assert C == CIN
    HW = H * W

    # im2col in the wrapper (XLA fuses the pad/slice/concat chain into one fusion writing the
    # (S*HW, KPAD) buffer once): NCHW -> NHWC, 'same' pad, 9 shifted taps + constant-1 bias column.
    x = jnp.transpose(batch, (0, 2, 3, 1))
    xp = jnp.pad(x, ((0, 0), (1, 1), (1, 1), (0, 0)))
    taps = [xp[:, ky:ky + H, kx:kx + W, :] for ky in range(KW) for kx in range(KW)]
    patches = jnp.concatenate(taps, axis=-1).reshape(S * HW, KTAPS)
    patches = jnp.concatenate([patches, jnp.ones((S * HW, 1), patches.dtype)], axis=-1)
    patches = jnp.pad(patches, ((0, 0), (0, KPAD - KTAPS_B))).astype(jnp.bfloat16)   # (S*HW, KPAD)

    cw = jnp.concatenate([conv_w.reshape(KTAPS, COUT), conv_b.reshape(1, COUT)], axis=0)
    cw = jnp.pad(cw, ((0, KPAD - KTAPS_B), (0, 0))).astype(jnp.bfloat16)             # (KPAD, COUT)

    packed = _pack_params(params)

    # Slice tile size: largest divisor of S whose per-step footprint (bf16 patches tile,
    # double-buffered by BlockSpec, + the f32 conv intermediate) stays within a conservative
    # VMEM budget (works under v5e's 16 MiB scoped default and v7x's 64 MiB physical VMEM).
    per_slice_bytes = HW * KPAD * 2 * 2 + HW * COUT * 4
    budget = 8 << 20
    sps = S
    while sps > 1 and (per_slice_bytes * sps > budget or S % sps != 0):
        sps -= 1
    num_steps = S // sps

    kernel = functools.partial(_fused_kernel, HW=HW, SPS=sps)
    flops = 2 * S * HW * KPAD * COUT + 2 * S * S * (COUT + 1) + 6 * S * COUT
    bytes_accessed = patches.size * 2 + cw.size * 2 + packed.size * 4 + 4

    out = pl.pallas_call(
        kernel,
        out_shape=jax.ShapeDtypeStruct((1, 1), jnp.float32),
        grid=(num_steps,),
        in_specs=[
            pl.BlockSpec((sps * HW, KPAD), lambda i: (i, 0)),   # per-step slice tile of patches
            pl.BlockSpec((KPAD, COUT), lambda i: (0, 0)),       # conv weights, resident
            pl.BlockSpec((8, COUT), lambda i: (0, 0)),          # packed head params, resident
        ],
        out_specs=pl.BlockSpec((1, 1), lambda i: (0, 0)),
        scratch_shapes=[pltpu.VMEM((S, COUT), jnp.float32)],    # per-slice pooled features
        compiler_params=pltpu.CompilerParams(
            dimension_semantics=("arbitrary",)),                # head needs all slices' features
        cost_estimate=pl.CostEstimate(
            flops=flops,
            transcendentals=S * S + 1,
            bytes_accessed=bytes_accessed),
    )(patches, cw, packed)
    return out.reshape(1)


# --------------------------------------------------------------------------------------
if __name__ == "__main__":
    key = jax.random.PRNGKey(0)
    kx, kw_, ks, km = jax.random.split(key, 4)

    # small shapes: S=8 slices per exam, 3x16x16 images
    S, C, H, W = 8, CIN, 16, 16
    batch = jax.random.normal(kx, (S, C, H, W), jnp.float32)

    # deterministic parameter init (synthetic — not a checkpoint load)
    conv_w = jax.random.normal(kw_, (KW, KW, CIN, COUT), jnp.float32) * 0.1
    conv_b = jnp.zeros((COUT,), jnp.float32)
    params = dict(
        norm_g=jnp.ones((COUT,), jnp.float32),
        norm_b=jnp.zeros((COUT,), jnp.float32),
        sfc_w=jax.random.normal(ks, (COUT,), jnp.float32) * 0.125,  # Linear(64,1) weight
        sfc_b=jnp.zeros((), jnp.float32),
        mlp_g=jnp.ones((COUT,), jnp.float32),
        mlp_b=jnp.zeros((COUT,), jnp.float32),
        mlp_w=jax.random.normal(km, (COUT,), jnp.float32) * 0.125,  # Linear(64,1) weight
        mlp_b2=jnp.zeros((), jnp.float32),
    )

    out = jax.jit(simple_trans_forward)(batch, conv_w, conv_b, params)
    jax.block_until_ready(out)
    assert out.shape == (1,) and bool(jnp.all(jnp.isfinite(out)))
    print("KERNEL_OK")
</pallas_src>

<mosaic_0001>
module attributes {stable_mosaic.version = 11 : i64} {
  func.func @_fused_kernel(%arg0: i32, %arg1: memref<2048x32xbf16, #tpu.memory_space<vmem>>, %arg2: memref<32x64xbf16, #tpu.memory_space<vmem>>, %arg3: memref<8x64xf32, #tpu.memory_space<vmem>>, %arg4: memref<1x1xf32, #tpu.memory_space<vmem>>, %arg5: memref<8x64xf32, #tpu.memory_space<vmem>>) attributes {dimension_semantics = [#tpu.dimension_semantics<arbitrary>], iteration_bounds = array<i64: 1>, scalar_prefetch = 0 : i64, scratch_operands = 1 : i64, tpu.core_type = #tpu.core_type<tc>, window_params = [{transform_indices = @transform_0, window_bounds = array<i64: 2048, 32>}, {pipeline_mode = #tpu.pipeline_mode<synchronous>, transform_indices = @transform_1, window_bounds = array<i64: 32, 64>}, {pipeline_mode = #tpu.pipeline_mode<synchronous>, transform_indices = @transform_2, window_bounds = array<i64: 8, 64>}, {pipeline_mode = #tpu.pipeline_mode<synchronous>, transform_indices = @transform_3, window_bounds = array<i64: 1, 1>}]} {
    %c0 = arith.constant 0 : index
    %c0_0 = arith.constant 0 : index
    %0 = vector.load %arg1[%c0, %c0_0] : memref<2048x32xbf16, #tpu.memory_space<vmem>>, vector<2048x32xbf16>
    %c0_1 = arith.constant 0 : index
    %c0_2 = arith.constant 0 : index
    %1 = vector.load %arg2[%c0_1, %c0_2] : memref<32x64xbf16, #tpu.memory_space<vmem>>, vector<32x64xbf16>
    %cst = arith.constant dense<0.000000e+00> : vector<2048x64xf32>
    %2 = tpu.matmul %0, %1, %cst {dimension_numbers = #tpu.dot_dimension_numbers<[1], [0], [0], [1], [0, 0, 1, 1], [], []>} : vector<2048x32xbf16>, vector<32x64xbf16>, vector<2048x64xf32> -> vector<2048x64xf32>
    %cst_3 = arith.constant 0.000000e+00 : f32
    %3 = vector.broadcast %cst_3 : f32 to vector<2048x64xf32>
    %4 = arith.maximumf %2, %3 : vector<2048x64xf32>
    %5 = vector.shape_cast %4 : vector<2048x64xf32> to vector<8x256x64xf32>
    %cst_4 = arith.constant dense<0xFF800000> : vector<8x64xf32>
    %6 = vector.multi_reduction <maximumf>, %5, %cst_4 [1] : vector<8x256x64xf32> to vector<8x64xf32>
    %c8_i32 = arith.constant 8 : i32
    %7 = arith.muli %arg0, %c8_i32 : i32
    %8 = tpu.assume_multiple %7, 8 : i32
    %9 = arith.index_cast %8 : i32 to index
    %c0_5 = arith.constant 0 : index
    %10 = vector.load %arg5[%9, %c0_5] : memref<8x64xf32, #tpu.memory_space<vmem>>, vector<8x64xf32>
    tpu.vector_store %arg5[%9, %c0_5], %6 {strides = array<i32>} : memref<8x64xf32, #tpu.memory_space<vmem>>, vector<8x64xf32>,
    %c0_i32 = arith.constant 0 : i32
    %11 = arith.cmpi eq, %arg0, %c0_i32 : i32
    %12 = arith.extui %11 : i1 to i32
    %c0_i32_6 = arith.constant 0 : i32
    %13 = arith.cmpi ne, %12, %c0_i32_6 : i32
    scf.if %13 {
      %c0_7 = arith.constant 0 : index
      %c0_8 = arith.constant 0 : index
      %14 = vector.load %arg5[%c0_7, %c0_8] : memref<8x64xf32, #tpu.memory_space<vmem>>, vector<8x64xf32>
      %c0_9 = arith.constant 0 : index
      %c0_10 = arith.constant 0 : index
      %15 = vector.load %arg3[%c0_9, %c0_10] : memref<8x64xf32, #tpu.memory_space<vmem>>, vector<1x64xf32>
      %c1 = arith.constant 1 : index
      %c0_11 = arith.constant 0 : index
      %16 = vector.load %arg3[%c1, %c0_11] : memref<8x64xf32, #tpu.memory_space<vmem>>, vector<1x64xf32>
      %c2 = arith.constant 2 : index
      %c0_12 = arith.constant 0 : index
      %17 = vector.load %arg3[%c2, %c0_12] : memref<8x64xf32, #tpu.memory_space<vmem>>, vector<1x64xf32>
      %c3 = arith.constant 3 : index
      %c0_13 = arith.constant 0 : index
      %18 = vector.load %arg3[%c3, %c0_13] : memref<8x64xf32, #tpu.memory_space<vmem>>, vector<1x64xf32>
      %c4 = arith.constant 4 : index
      %c0_14 = arith.constant 0 : index
      %19 = vector.load %arg3[%c4, %c0_14] : memref<8x64xf32, #tpu.memory_space<vmem>>, vector<1x64xf32>
      %c5 = arith.constant 5 : index
      %c0_15 = arith.constant 0 : index
      %20 = vector.load %arg3[%c5, %c0_15] : memref<8x64xf32, #tpu.memory_space<vmem>>, vector<1x64xf32>
      %c6 = arith.constant 6 : index
      %c0_16 = arith.constant 0 : index
      %21 = vector.load %arg3[%c6, %c0_16] : memref<8x64xf32, #tpu.memory_space<vmem>>, vector<1x1xf32>
      %c6_17 = arith.constant 6 : index
      %c1_18 = arith.constant 1 : index
      %22 = vector.load %arg3[%c6_17, %c1_18] : memref<8x64xf32, #tpu.memory_space<vmem>>, vector<1x1xf32>
      %cst_19 = arith.constant dense<0.000000e+00> : vector<8xf32>
      %23 = vector.multi_reduction <add>, %14, %cst_19 [1] : vector<8x64xf32> to vector<8xf32>
      %24 = vector.shape_cast %23 : vector<8xf32> to vector<8x1xf32>
      %cst_20 = arith.constant 6.400000e+01 : f32
      %25 = vector.broadcast %cst_20 : f32 to vector<8x1xf32>
      %26 = arith.divf %24, %25 : vector<8x1xf32>
      %27 = vector.broadcast %26 : vector<8x1xf32> to vector<8x64xf32>
      %28 = arith.subf %14, %27 : vector<8x64xf32>
      %29 = arith.mulf %28, %28 : vector<8x64xf32>
      %cst_21 = arith.constant dense<0.000000e+00> : vector<8xf32>
      %30 = vector.multi_reduction <add>, %29, %cst_21 [1] : vector<8x64xf32> to vector<8xf32>
      %31 = vector.shape_cast %30 : vector<8xf32> to vector<8x1xf32>
      %cst_22 = arith.constant 6.400000e+01 : f32
      %32 = vector.broadcast %cst_22 : f32 to vector<8x1xf32>
      %33 = arith.divf %31, %32 : vector<8x1xf32>
      %34 = vector.broadcast %26 : vector<8x1xf32> to vector<8x64xf32>
      %35 = arith.subf %14, %34 : vector<8x64xf32>
      %cst_23 = arith.constant 9.99999974E-6 : f32
      %36 = vector.broadcast %cst_23 : f32 to vector<8x1xf32>
      %37 = arith.addf %33, %36 : vector<8x1xf32>
      %38 = math.rsqrt %37 : vector<8x1xf32>
      %39 = vector.broadcast %38 : vector<8x1xf32> to vector<8x64xf32>
      %40 = arith.mulf %35, %39 : vector<8x64xf32>
      %41 = vector.broadcast %15 : vector<1x64xf32> to vector<8x64xf32>
      %42 = arith.mulf %40, %41 : vector<8x64xf32>
      %43 = vector.broadcast %16 : vector<1x64xf32> to vector<8x64xf32>
      %44 = arith.addf %42, %43 : vector<8x64xf32>
      %45 = vector.broadcast %17 : vector<1x64xf32> to vector<8x64xf32>
      %46 = arith.mulf %44, %45 : vector<8x64xf32>
      %cst_24 = arith.constant dense<0.000000e+00> : vector<8xf32>
      %47 = vector.multi_reduction <add>, %46, %cst_24 [1] : vector<8x64xf32> to vector<8xf32>
      %48 = vector.shape_cast %47 : vector<8xf32> to vector<8x1xf32>
      %49 = vector.broadcast %21 : vector<1x1xf32> to vector<8x1xf32>
      %50 = arith.addf %48, %49 : vector<8x1xf32>
      %cst_25 = arith.constant dense<0.000000e+00> : vector<8x8xf32>
      %51 = tpu.matmul %50, %50, %cst_25 {dimension_numbers = #tpu.dot_dimension_numbers<[1], [1], [0], [0], [0, 0, 1, 0], [], []>} : vector<8x1xf32>, vector<8x1xf32>, vector<8x8xf32> -> vector<8x8xf32>
      %cst_26 = arith.constant 5.000000e-01 : f32
      %52 = vector.broadcast %cst_26 : f32 to vector<8x8xf32>
      %53 = arith.mulf %51, %52 : vector<8x8xf32>
      %cst_27 = arith.constant dense<0xFF800000> : vector<8xf32>
      %54 = vector.multi_reduction <maximumf>, %53, %cst_27 [1] : vector<8x8xf32> to vector<8xf32>
      %55 = vector.shape_cast %54 : vector<8xf32> to vector<8x1xf32>
      %56 = vector.broadcast %55 : vector<8x1xf32> to vector<8x8xf32>
      %57 = arith.subf %53, %56 : vector<8x8xf32>
      %58 = math.exp %57 : vector<8x8xf32>
      %cst_28 = arith.constant dense<0.000000e+00> : vector<8xf32>
      %59 = vector.multi_reduction <add>, %58, %cst_28 [1] : vector<8x8xf32> to vector<8xf32>
      %60 = vector.shape_cast %59 : vector<8xf32> to vector<8x1xf32>
      %61 = vector.broadcast %60 : vector<8x1xf32> to vector<8x8xf32>
      %62 = arith.divf %58, %61 : vector<8x8xf32>
      %cst_29 = arith.constant dense<0.000000e+00> : vector<8x64xf32>
      %63 = tpu.matmul %62, %14, %cst_29 {dimension_numbers = #tpu.dot_dimension_numbers<[1], [0], [0], [1], [0, 0, 1, 1], [], []>} : vector<8x8xf32>, vector<8x64xf32>, vector<8x64xf32> -> vector<8x64xf32>
      %64 = arith.addf %14, %63 : vector<8x64xf32>
      %cst_30 = arith.constant dense<0xFF800000> : vector<64xf32>
      %65 = vector.multi_reduction <maximumf>, %64, %cst_30 [0] : vector<8x64xf32> to vector<64xf32>
      %66 = vector.shape_cast %65 : vector<64xf32> to vector<1x64xf32>
      %cst_31 = arith.constant dense<0.000000e+00> : vector<1xf32>
      %67 = vector.multi_reduction <add>, %66, %cst_31 [1] : vector<1x64xf32> to vector<1xf32>
      %68 = vector.shape_cast %67 : vector<1xf32> to vector<1x1xf32>
      %cst_32 = arith.constant 6.400000e+01 : f32
      %69 = vector.broadcast %cst_32 : f32 to vector<1x1xf32>
      %70 = arith.divf %68, %69 : vector<1x1xf32>
      %71 = vector.broadcast %70 : vector<1x1xf32> to vector<1x64xf32>
      %72 = arith.subf %66, %71 : vector<1x64xf32>
      %73 = arith.mulf %72, %72 : vector<1x64xf32>
      %cst_33 = arith.constant dense<0.000000e+00> : vector<1xf32>
      %74 = vector.multi_reduction <add>, %73, %cst_33 [1] : vector<1x64xf32> to vector<1xf32>
      %75 = vector.shape_cast %74 : vector<1xf32> to vector<1x1xf32>
      %cst_34 = arith.constant 6.400000e+01 : f32
      %76 = vector.broadcast %cst_34 : f32 to vector<1x1xf32>
      %77 = arith.divf %75, %76 : vector<1x1xf32>
      %78 = vector.broadcast %70 : vector<1x1xf32> to vector<1x64xf32>
      %79 = arith.subf %66, %78 : vector<1x64xf32>
      %cst_35 = arith.constant 9.99999974E-6 : f32
      %80 = vector.broadcast %cst_35 : f32 to vector<1x1xf32>
      %81 = arith.addf %77, %80 : vector<1x1xf32>
      %82 = math.rsqrt %81 : vector<1x1xf32>
      %83 = vector.broadcast %82 : vector<1x1xf32> to vector<1x64xf32>
      %84 = arith.mulf %79, %83 : vector<1x64xf32>
      %85 = arith.mulf %84, %18 : vector<1x64xf32>
      %86 = arith.addf %85, %19 : vector<1x64xf32>
      %87 = arith.mulf %86, %20 : vector<1x64xf32>
      %cst_36 = arith.constant dense<0.000000e+00> : vector<1xf32>
      %88 = vector.multi_reduction <add>, %87, %cst_36 [1] : vector<1x64xf32> to vector<1xf32>
      %89 = vector.shape_cast %88 : vector<1xf32> to vector<1x1xf32>
      %90 = arith.addf %89, %22 : vector<1x1xf32>
      %91 = arith.negf %90 : vector<1x1xf32>
      %92 = math.exp %91 : vector<1x1xf32>
      %cst_37 = arith.constant 1.000000e+00 : f32
      %93 = vector.broadcast %cst_37 : f32 to vector<1x1xf32>
      %94 = arith.addf %93, %92 : vector<1x1xf32>
      %95 = arith.divf %93, %94 : vector<1x1xf32>
      %c0_38 = arith.constant 0 : index
      %c0_39 = arith.constant 0 : index
      %96 = vector.load %arg4[%c0_38, %c0_39] : memref<1x1xf32, #tpu.memory_space<vmem>>, vector<1x1xf32>
      tpu.vector_store %arg4[%c0_38, %c0_39], %95 {strides = array<i32>} : memref<1x1xf32, #tpu.memory_space<vmem>>, vector<1x1xf32>,
    } else {
    }
    return
  }
  func.func @transform_0(%arg0: i32) -> (i32, i32) {
    %c0_i32 = arith.constant 0 : i32
    %c0_i32_0 = arith.constant 0 : i32
    return %arg0, %c0_i32 : i32, i32
  }
  func.func @transform_1(%arg0: i32) -> (i32, i32) {
    %c0_i32 = arith.constant 0 : i32
    %c0_i32_0 = arith.constant 0 : i32
    %c0_i32_1 = arith.constant 0 : i32
    return %c0_i32, %c0_i32_0 : i32, i32
  }
  func.func @transform_2(%arg0: i32) -> (i32, i32) {
    %c0_i32 = arith.constant 0 : i32
    %c0_i32_0 = arith.constant 0 : i32
    %c0_i32_1 = arith.constant 0 : i32
    return %c0_i32, %c0_i32_0 : i32, i32
  }
  func.func @transform_3(%arg0: i32) -> (i32, i32) {
    %c0_i32 = arith.constant 0 : i32
    %c0_i32_0 = arith.constant 0 : i32
    %c0_i32_1 = arith.constant 0 : i32
    return %c0_i32, %c0_i32_0 : i32, i32
  }
}

</mosaic_0001>

<llo_original>
// kernel: simple_trans_forward.1
$region0: #{simple_trans_forward.1}
  #allocation0 [shape = 'u32[]', space=smem, size = 0x4, offset = 0x4, fixed_abs, tag = 'smem constant byte address 0x4 - core index']
  #allocation1 [shape = 'u32[72,128]{1,0:T(1,128)}', space=vmem, size = 0x9000, scoped, tag = 'internal scratch']
  #allocation2 [shape = 'f32[8,64]{1,0:T(8,128)}', space=vmem, size = 0x1000, scoped, tag = 'scratch operand']
  %s0 = inlined_call_operand.vmem [shape: bf16[2048,32], index: 0, kind: input, shape index: {}]
  %s1 = inlined_call_operand.vmem [shape: bf16[32,64], index: 1, kind: input, shape index: {}]
  %s2 = inlined_call_operand.vmem [shape: f32[8,64], index: 2, kind: input, shape index: {}]
  %s3 = inlined_call_operand.hbm [shape: f32[1,1], index: 3, kind: output, shape index: {}]
  %s4 = sld [smem:[#allocation0]]
  $region26: #{simple_trans_forward.1} parent=0
    _
  %s6 = ssub.s32 1, %s4
  %s7 = scalar_select 0, %s6, %s4
  $region1: #{simple_trans_forward.1} parent=0
    #allocation3 [shape = 'u8[512]{0}', space=vmem, size = 0x400, scoped, tag = 'output window, operand 0, single buffered']
    #allocation4 [shape = 's32[1]{0}', space=sflag, size = 0x4, scoped, tag = 'scoped memory for simple_trans_forward.1']
    %8 = vsyncpa [#allocation4], 0
    // Predicated region
    $region2: #{simple_trans_forward.1} parent=1 // pred_check
      _
    $region3: #{simple_trans_forward.1} parent=1 // pred_check_branch
      %10 = sbr.rel (0) target = $region5
    $region4: #{simple_trans_forward.1} parent=1 // pred_region
      _
    $region5: #{simple_trans_forward.1} parent=1 // pred_fallthru
      _
    // Predicated region
    $region6: #{simple_trans_forward.1} parent=1 // pred_check
      _
    $region7: #{simple_trans_forward.1} parent=1 // pred_check_branch
      %12 = sbr.rel (0) target = $region9
    $region8: #{simple_trans_forward.1} parent=1 // pred_region
      _
    $region9: #{simple_trans_forward.1} parent=1 // pred_fallthru
      _
    // Predicated region
    $region10: #{simple_trans_forward.1} parent=1 // pred_check
      _
    $region11: #{simple_trans_forward.1} parent=1 // pred_check_branch
      %14 = sbr.rel (0) target = $region13
    $region12: #{simple_trans_forward.1} parent=1 // pred_region
      _
    $region13: #{simple_trans_forward.1} parent=1 // pred_fallthru
      _
    %v16 = vld [vmem:[%s0] sm:$0xf]
    %v17 = vld [vmem:[%s0 + $0x4] sm:$0xf]
    %v18 = vld [vmem:[%s0 + $0x8] sm:$0xf]
    %v19 = vld [vmem:[%s0 + $0xc] sm:$0xf]
    %v20 = vld [vmem:[%s0 + $0x10] sm:$0xf]
    %v21 = vld [vmem:[%s0 + $0x14] sm:$0xf]
    %v22 = vld [vmem:[%s0 + $0x18] sm:$0xf]
    %v23 = vld [vmem:[%s0 + $0x1c] sm:$0xf]
    %v24 = vld [vmem:[%s0 + $0x20] sm:$0xf]
    %v25 = vld [vmem:[%s0 + $0x24] sm:$0xf]
    %v26 = vld [vmem:[%s0 + $0x28] sm:$0xf]
    %v27 = vld [vmem:[%s0 + $0x2c] sm:$0xf]
    %v28 = vld [vmem:[%s0 + $0x30] sm:$0xf]
    %v29 = vld [vmem:[%s0 + $0x34] sm:$0xf]
    %v30 = vld [vmem:[%s0 + $0x38] sm:$0xf]
    %v31 = vld [vmem:[%s0 + $0x3c] sm:$0xf]
    %v32 = vld [vmem:[%s0 + $0x40] sm:$0xf]
    %v33 = vld [vmem:[%s0 + $0x44] sm:$0xf]
    %v34 = vld [vmem:[%s0 + $0x48] sm:$0xf]
    %v35 = vld [vmem:[%s0 + $0x4c] sm:$0xf]
    %v36 = vld [vmem:[%s0 + $0x50] sm:$0xf]
    %v37 = vld [vmem:[%s0 + $0x54] sm:$0xf]
    %v38 = vld [vmem:[%s0 + $0x58] sm:$0xf]
    %v39 = vld [vmem:[%s0 + $0x5c] sm:$0xf]
    %v40 = vld [vmem:[%s0 + $0x60] sm:$0xf]
    %v41 = vld [vmem:[%s0 + $0x64] sm:$0xf]
    %v42 = vld [vmem:[%s0 + $0x68] sm:$0xf]
    %v43 = vld [vmem:[%s0 + $0x6c] sm:$0xf]
    %v44 = vld [vmem:[%s0 + $0x70] sm:$0xf]
    %v45 = vld [vmem:[%s0 + $0x74] sm:$0xf]
    %v46 = vld [vmem:[%s0 + $0x78] sm:$0xf]
    %v47 = vld [vmem:[%s0 + $0x7c] sm:$0xf]
    %v48 = vld [vmem:[%s0 + $0x80] sm:$0xf]
    %v49 = vld [vmem:[%s0 + $0x84] sm:$0xf]
    %v50 = vld [vmem:[%s0 + $0x88] sm:$0xf]
    %v51 = vld [vmem:[%s0 + $0x8c] sm:$0xf]
    %v52 = vld [vmem:[%s0 + $0x90] sm:$0xf]
    %v53 = vld [vmem:[%s0 + $0x94] sm:$0xf]
    %v54 = vld [vmem:[%s0 + $0x98] sm:$0xf]
    %v55 = vld [vmem:[%s0 + $0x9c] sm:$0xf]
    %v56 = vld [vmem:[%s0 + $0xa0] sm:$0xf]
    %v57 = vld [vmem:[%s0 + $0xa4] sm:$0xf]
    %v58 = vld [vmem:[%s0 + $0xa8] sm:$0xf]
    %v59 = vld [vmem:[%s0 + $0xac] sm:$0xf]
    %v60 = vld [vmem:[%s0 + $0xb0] sm:$0xf]
    %v61 = vld [vmem:[%s0 + $0xb4] sm:$0xf]
    %v62 = vld [vmem:[%s0 + $0xb8] sm:$0xf]
    %v63 = vld [vmem:[%s0 + $0xbc] sm:$0xf]
    %v64 = vld [vmem:[%s0 + $0xc0] sm:$0xf]
    %v65 = vld [vmem:[%s0 + $0xc4] sm:$0xf]
    %v66 = vld [vmem:[%s0 + $0xc8] sm:$0xf]
    %v67 = vld [vmem:[%s0 + $0xcc] sm:$0xf]
    %v68 = vld [vmem:[%s0 + $0xd0] sm:$0xf]
    %v69 = vld [vmem:[%s0 + $0xd4] sm:$0xf]
    %v70 = vld [vmem:[%s0 + $0xd8] sm:$0xf]
    %v71 = vld [vmem:[%s0 + $0xdc] sm:$0xf]
    %v72 = vld [vmem:[%s0 + $0xe0] sm:$0xf]
    %v73 = vld [vmem:[%s0 + $0xe4] sm:$0xf]
    %v74 = vld [vmem:[%s0 + $0xe8] sm:$0xf]
    %v75 = vld [vmem:[%s0 + $0xec] sm:$0xf]
    %v76 = vld [vmem:[%s0 + $0xf0] sm:$0xf]
    %v77 = vld [vmem:[%s0 + $0xf4] sm:$0xf]
    %v78 = vld [vmem:[%s0 + $0xf8] sm:$0xf]
    %v79 = vld [vmem:[%s0 + $0xfc] sm:$0xf]
    %v80 = vld [vmem:[%s0 + $0x100] sm:$0xf]
    %v81 = vld [vmem:[%s0 + $0x104] sm:$0xf]
    %v82 = vld [vmem:[%s0 + $0x108] sm:$0xf]
    %v83 = vld [vmem:[%s0 + $0x10c] sm:$0xf]
    %v84 = vld [vmem:[%s0 + $0x110] sm:$0xf]
    %v85 = vld [vmem:[%s0 + $0x114] sm:$0xf]
    %v86 = vld [vmem:[%s0 + $0x118] sm:$0xf]
    %v87 = vld [vmem:[%s0 + $0x11c] sm:$0xf]
    %v88 = vld [vmem:[%s0 + $0x120] sm:$0xf]
    %v89 = vld [vmem:[%s0 + $0x124] sm:$0xf]
    %v90 = vld [vmem:[%s0 + $0x128] sm:$0xf]
    %v91 = vld [vmem:[%s0 + $0x12c] sm:$0xf]
    %v92 = vld [vmem:[%s0 + $0x130] sm:$0xf]
    %v93 = vld [vmem:[%s0 + $0x134] sm:$0xf]
    %v94 = vld [vmem:[%s0 + $0x138] sm:$0xf]
    %v95 = vld [vmem:[%s0 + $0x13c] sm:$0xf]
    %v96 = vld [vmem:[%s0 + $0x140] sm:$0xf]
    %v97 = vld [vmem:[%s0 + $0x144] sm:$0xf]
    %v98 = vld [vmem:[%s0 + $0x148] sm:$0xf]
    %v99 = vld [vmem:[%s0 + $0x14c] sm:$0xf]
    %v100 = vld [vmem:[%s0 + $0x150] sm:$0xf]
    %v101 = vld [vmem:[%s0 + $0x154] sm:$0xf]
    %v102 = vld [vmem:[%s0 + $0x158] sm:$0xf]
    %v103 = vld [vmem:[%s0 + $0x15c] sm:$0xf]
    %v104 = vld [vmem:[%s0 + $0x160] sm:$0xf]
    %v105 = vld [vmem:[%s0 + $0x164] sm:$0xf]
    %v106 = vld [vmem:[%s0 + $0x168] sm:$0xf]
    %v107 = vld [vmem:[%s0 + $0x16c] sm:$0xf]
    %v108 = vld [vmem:[%s0 + $0x170] sm:$0xf]
    %v109 = vld [vmem:[%s0 + $0x174] sm:$0xf]
    %v110 = vld [vmem:[%s0 + $0x178] sm:$0xf]
    %v111 = vld [vmem:[%s0 + $0x17c] sm:$0xf]
    %v112 = vld [vmem:[%s0 + $0x180] sm:$0xf]
    %v113 = vld [vmem:[%s0 + $0x184] sm:$0xf]
    %v114 = vld [vmem:[%s0 + $0x188] sm:$0xf]
    %v115 = vld [vmem:[%s0 + $0x18c] sm:$0xf]
    %v116 = vld [vmem:[%s0 + $0x190] sm:$0xf]
    %v117 = vld [vmem:[%s0 + $0x194] sm:$0xf]
    %v118 = vld [vmem:[%s0 + $0x198] sm:$0xf]
    %v119 = vld [vmem:[%s0 + $0x19c] sm:$0xf]
    %v120 = vld [vmem:[%s0 + $0x1a0] sm:$0xf]
    %v121 = vld [vmem:[%s0 + $0x1a4] sm:$0xf]
    %v122 = vld [vmem:[%s0 + $0x1a8] sm:$0xf]
    %v123 = vld [vmem:[%s0 + $0x1ac] sm:$0xf]
    %v124 = vld [vmem:[%s0 + $0x1b0] sm:$0xf]
    %v125 = vld [vmem:[%s0 + $0x1b4] sm:$0xf]
    %v126 = vld [vmem:[%s0 + $0x1b8] sm:$0xf]
    %v127 = vld [vmem:[%s0 + $0x1bc] sm:$0xf]
    %v128 = vld [vmem:[%s0 + $0x1c0] sm:$0xf]
    %v129 = vld [vmem:[%s0 + $0x1c4] sm:$0xf]
    %v130 = vld [vmem:[%s0 + $0x1c8] sm:$0xf]
    %v131 = vld [vmem:[%s0 + $0x1cc] sm:$0xf]
    %v132 = vld [vmem:[%s0 + $0x1d0] sm:$0xf]
    %v133 = vld [vmem:[%s0 + $0x1d4] sm:$0xf]
    %v134 = vld [vmem:[%s0 + $0x1d8] sm:$0xf]
    %v135 = vld [vmem:[%s0 + $0x1dc] sm:$0xf]
    %v136 = vld [vmem:[%s0 + $0x1e0] sm:$0xf]
    %v137 = vld [vmem:[%s0 + $0x1e4] sm:$0xf]
    %v138 = vld [vmem:[%s0 + $0x1e8] sm:$0xf]
    %v139 = vld [vmem:[%s0 + $0x1ec] sm:$0xf]
    %v140 = vld [vmem:[%s0 + $0x1f0] sm:$0xf]
    %v141 = vld [vmem:[%s0 + $0x1f4] sm:$0xf]
    %v142 = vld [vmem:[%s0 + $0x1f8] sm:$0xf]
    %v143 = vld [vmem:[%s0 + $0x1fc] sm:$0xf]
    %v144 = vld [vmem:[%s0 + $0x200] sm:$0xf]
    %v145 = vld [vmem:[%s0 + $0x204] sm:$0xf]
    %v146 = vld [vmem:[%s0 + $0x208] sm:$0xf]
    %v147 = vld [vmem:[%s0 + $0x20c] sm:$0xf]
    %v148 = vld [vmem:[%s0 + $0x210] sm:$0xf]
    %v149 = vld [vmem:[%s0 + $0x214] sm:$0xf]
    %v150 = vld [vmem:[%s0 + $0x218] sm:$0xf]
    %v151 = vld [vmem:[%s0 + $0x21c] sm:$0xf]
    %v152 = vld [vmem:[%s0 + $0x220] sm:$0xf]
    %v153 = vld [vmem:[%s0 + $0x224] sm:$0xf]
    %v154 = vld [vmem:[%s0 + $0x228] sm:$0xf]
    %v155 = vld [vmem:[%s0 + $0x22c] sm:$0xf]
    %v156 = vld [vmem:[%s0 + $0x230] sm:$0xf]
    %v157 = vld [vmem:[%s0 + $0x234] sm:$0xf]
    %v158 = vld [vmem:[%s0 + $0x238] sm:$0xf]
    %v159 = vld [vmem:[%s0 + $0x23c] sm:$0xf]
    %v160 = vld [vmem:[%s0 + $0x240] sm:$0xf]
    %v161 = vld [vmem:[%s0 + $0x244] sm:$0xf]
    %v162 = vld [vmem:[%s0 + $0x248] sm:$0xf]
    %v163 = vld [vmem:[%s0 + $0x24c] sm:$0xf]
    %v164 = vld [vmem:[%s0 + $0x250] sm:$0xf]
    %v165 = vld [vmem:[%s0 + $0x254] sm:$0xf]
    %v166 = vld [vmem:[%s0 + $0x258] sm:$0xf]
    %v167 = vld [vmem:[%s0 + $0x25c] sm:$0xf]
    %v168 = vld [vmem:[%s0 + $0x260] sm:$0xf]
    %v169 = vld [vmem:[%s0 + $0x264] sm:$0xf]
    %v170 = vld [vmem:[%s0 + $0x268] sm:$0xf]
    %v171 = vld [vmem:[%s0 + $0x26c] sm:$0xf]
    %v172 = vld [vmem:[%s0 + $0x270] sm:$0xf]
    %v173 = vld [vmem:[%s0 + $0x274] sm:$0xf]
    %v174 = vld [vmem:[%s0 + $0x278] sm:$0xf]
    %v175 = vld [vmem:[%s0 + $0x27c] sm:$0xf]
    %v176 = vld [vmem:[%s0 + $0x280] sm:$0xf]
    %v177 = vld [vmem:[%s0 + $0x284] sm:$0xf]
    %v178 = vld [vmem:[%s0 + $0x288] sm:$0xf]
    %v179 = vld [vmem:[%s0 + $0x28c] sm:$0xf]
    %v180 = vld [vmem:[%s0 + $0x290] sm:$0xf]
    %v181 = vld [vmem:[%s0 + $0x294] sm:$0xf]
    %v182 = vld [vmem:[%s0 + $0x298] sm:$0xf]
    %v183 = vld [vmem:[%s0 + $0x29c] sm:$0xf]
    %v184 = vld [vmem:[%s0 + $0x2a0] sm:$0xf]
    %v185 = vld [vmem:[%s0 + $0x2a4] sm:$0xf]
    %v186 = vld [vmem:[%s0 + $0x2a8] sm:$0xf]
    %v187 = vld [vmem:[%s0 + $0x2ac] sm:$0xf]
    %v188 = vld [vmem:[%s0 + $0x2b0] sm:$0xf]
    %v189 = vld [vmem:[%s0 + $0x2b4] sm:$0xf]
    %v190 = vld [vmem:[%s0 + $0x2b8] sm:$0xf]
    %v191 = vld [vmem:[%s0 + $0x2bc] sm:$0xf]
    %v192 = vld [vmem:[%s0 + $0x2c0] sm:$0xf]
    %v193 = vld [vmem:[%s0 + $0x2c4] sm:$0xf]
    %v194 = vld [vmem:[%s0 + $0x2c8] sm:$0xf]
    %v195 = vld [vmem:[%s0 + $0x2cc] sm:$0xf]
    %v196 = vld [vmem:[%s0 + $0x2d0] sm:$0xf]
    %v197 = vld [vmem:[%s0 + $0x2d4] sm:$0xf]
    %v198 = vld [vmem:[%s0 + $0x2d8] sm:$0xf]
    %v199 = vld [vmem:[%s0 + $0x2dc] sm:$0xf]
    %v200 = vld [vmem:[%s0 + $0x2e0] sm:$0xf]
    %v201 = vld [vmem:[%s0 + $0x2e4] sm:$0xf]
    %v202 = vld [vmem:[%s0 + $0x2e8] sm:$0xf]
    %v203 = vld [vmem:[%s0 + $0x2ec] sm:$0xf]
    %v204 = vld [vmem:[%s0 + $0x2f0] sm:$0xf]
    %v205 = vld [vmem:[%s0 + $0x2f4] sm:$0xf]
    %v206 = vld [vmem:[%s0 + $0x2f8] sm:$0xf]
    %v207 = vld [vmem:[%s0 + $0x2fc] sm:$0xf]
    %v208 = vld [vmem:[%s0 + $0x300] sm:$0xf]
    %v209 = vld [vmem:[%s0 + $0x304] sm:$0xf]
    %v210 = vld [vmem:[%s0 + $0x308] sm:$0xf]
    %v211 = vld [vmem:[%s0 + $0x30c] sm:$0xf]
    %v212 = vld [vmem:[%s0 + $0x310] sm:$0xf]
    %v213 = vld [vmem:[%s0 + $0x314] sm:$0xf]
    %v214 = vld [vmem:[%s0 + $0x318] sm:$0xf]
    %v215 = vld [vmem:[%s0 + $0x31c] sm:$0xf]
    %v216 = vld [vmem:[%s0 + $0x320] sm:$0xf]
    %v217 = vld [vmem:[%s0 + $0x324] sm:$0xf]
    %v218 = vld [vmem:[%s0 + $0x328] sm:$0xf]
    %v219 = vld [vmem:[%s0 + $0x32c] sm:$0xf]
    %v220 = vld [vmem:[%s0 + $0x330] sm:$0xf]
    %v221 = vld [vmem:[%s0 + $0x334] sm:$0xf]
    %v222 = vld [vmem:[%s0 + $0x338] sm:$0xf]
    %v223 = vld [vmem:[%s0 + $0x33c] sm:$0xf]
    %v224 = vld [vmem:[%s0 + $0x340] sm:$0xf]
    %v225 = vld [vmem:[%s0 + $0x344] sm:$0xf]
    %v226 = vld [vmem:[%s0 + $0x348] sm:$0xf]
    %v227 = vld [vmem:[%s0 + $0x34c] sm:$0xf]
    %v228 = vld [vmem:[%s0 + $0x350] sm:$0xf]
    %v229 = vld [vmem:[%s0 + $0x354] sm:$0xf]
    %v230 = vld [vmem:[%s0 + $0x358] sm:$0xf]
    %v231 = vld [vmem:[%s0 + $0x35c] sm:$0xf]
    %v232 = vld [vmem:[%s0 + $0x360] sm:$0xf]
    %v233 = vld [vmem:[%s0 + $0x364] sm:$0xf]
    %v234 = vld [vmem:[%s0 + $0x368] sm:$0xf]
    %v235 = vld [vmem:[%s0 + $0x36c] sm:$0xf]
    %v236 = vld [vmem:[%s0 + $0x370] sm:$0xf]
    %v237 = vld [vmem:[%s0 + $0x374] sm:$0xf]
    %v238 = vld [vmem:[%s0 + $0x378] sm:$0xf]
    %v239 = vld [vmem:[%s0 + $0x37c] sm:$0xf]
    %v240 = vld [vmem:[%s0 + $0x380] sm:$0xf]
    %v241 = vld [vmem:[%s0 + $0x384] sm:$0xf]
    %v242 = vld [vmem:[%s0 + $0x388] sm:$0xf]
    %v243 = vld [vmem:[%s0 + $0x38c] sm:$0xf]
    %v244 = vld [vmem:[%s0 + $0x390] sm:$0xf]
    %v245 = vld [vmem:[%s0 + $0x394] sm:$0xf]
    %v246 = vld [vmem:[%s0 + $0x398] sm:$0xf]
    %v247 = vld [vmem:[%s0 + $0x39c] sm:$0xf]
    %v248 = vld [vmem:[%s0 + $0x3a0] sm:$0xf]
    %v249 = vld [vmem:[%s0 + $0x3a4] sm:$0xf]
    %v250 = vld [vmem:[%s0 + $0x3a8] sm:$0xf]
    %v251 = vld [vmem:[%s0 + $0x3ac] sm:$0xf]
    %v252 = vld [vmem:[%s0 + $0x3b0] sm:$0xf]
    %v253 = vld [vmem:[%s0 + $0x3b4] sm:$0xf]
    %v254 = vld [vmem:[%s0 + $0x3b8] sm:$0xf]
    %v255 = vld [vmem:[%s0 + $0x3bc] sm:$0xf]
    %v256 = vld [vmem:[%s0 + $0x3c0] sm:$0xf]
    %v257 = vld [vmem:[%s0 + $0x3c4] sm:$0xf]
    %v258 = vld [vmem:[%s0 + $0x3c8] sm:$0xf]
    %v259 = vld [vmem:[%s0 + $0x3cc] sm:$0xf]
    %v260 = vld [vmem:[%s0 + $0x3d0] sm:$0xf]
    %v261 = vld [vmem:[%s0 + $0x3d4] sm:$0xf]
    %v262 = vld [vmem:[%s0 + $0x3d8] sm:$0xf]
    %v263 = vld [vmem:[%s0 + $0x3dc] sm:$0xf]
    %v264 = vld [vmem:[%s0 + $0x3e0] sm:$0xf]
    %v265 = vld [vmem:[%s0 + $0x3e4] sm:$0xf]
    %v266 = vld [vmem:[%s0 + $0x3e8] sm:$0xf]
    %v267 = vld [vmem:[%s0 + $0x3ec] sm:$0xf]
    %v268 = vld [vmem:[%s0 + $0x3f0] sm:$0xf]
    %v269 = vld [vmem:[%s0 + $0x3f4] sm:$0xf]
    %v270 = vld [vmem:[%s0 + $0x3f8] sm:$0xf]
    %v271 = vld [vmem:[%s0 + $0x3fc] sm:$0xf]
    %v272 = vld [vmem:[%s1] sm:$0xf]
    %v273 = vld [vmem:[%s1 + $0x4] sm:$0xf]
    %v274 = vld [vmem:[%s1 + $0x8] sm:$0xf]
    %v275 = vld [vmem:[%s1 + $0xc] sm:$0xf]
    %v532 = vunpack.c.l.b16 %v16
    %v533 = vunpack.c.l.b16 %v17
    %v534 = vunpack.c.l.b16 %v18
    %v535 = vunpack.c.l.b16 %v19
    %v536 = vunpack.c.l.b16 %v20
    %v537 = vunpack.c.l.b16 %v21
    %v538 = vunpack.c.l.b16 %v22
    %v539 = vunpack.c.l.b16 %v23
    %v540 = vunpack.c.l.b16 %v24
    %v541 = vunpack.c.l.b16 %v25
    %v542 = vunpack.c.l.b16 %v26
    %v543 = vunpack.c.l.b16 %v27
    %v544 = vunpack.c.l.b16 %v28
    %v545 = vunpack.c.l.b16 %v29
    %v546 = vunpack.c.l.b16 %v30
    %v547 = vunpack.c.l.b16 %v31
    %v548 = vunpack.c.l.b16 %v32
    %v549 = vunpack.c.l.b16 %v33
    %v550 = vunpack.c.l.b16 %v34
    %v551 = vunpack.c.l.b16 %v35
    %v552 = vunpack.c.l.b16 %v36
    %v553 = vunpack.c.l.b16 %v37
    %v554 = vunpack.c.l.b16 %v38
    %v555 = vunpack.c.l.b16 %v39
    %v556 = vunpack.c.l.b16 %v40
    %v557 = vunpack.c.l.b16 %v41
    %v558 = vunpack.c.l.b16 %v42
    %v559 = vunpack.c.l.b16 %v43
    %v560 = vunpack.c.l.b16 %v44
    %v561 = vunpack.c.l.b16 %v45
    %v562 = vunpack.c.l.b16 %v46
    %v563 = vunpack.c.l.b16 %v47
    %v564 = vunpack.c.l.b16 %v48
    %v565 = vunpack.c.l.b16 %v49
    %v566 = vunpack.c.l.b16 %v50
    %v567 = vunpack.c.l.b16 %v51
    %v568 = vunpack.c.l.b16 %v52
    %v569 = vunpack.c.l.b16 %v53
    %v570 = vunpack.c.l.b16 %v54
    %v571 = vunpack.c.l.b16 %v55
    %v572 = vunpack.c.l.b16 %v56
    %v573 = vunpack.c.l.b16 %v57
    %v574 = vunpack.c.l.b16 %v58
    %v575 = vunpack.c.l.b16 %v59
    %v576 = vunpack.c.l.b16 %v60
    %v577 = vunpack.c.l.b16 %v61
    %v578 = vunpack.c.l.b16 %v62
    %v579 = vunpack.c.l.b16 %v63
    %v580 = vunpack.c.l.b16 %v64
    %v581 = vunpack.c.l.b16 %v65
    %v582 = vunpack.c.l.b16 %v66
    %v583 = vunpack.c.l.b16 %v67
    %v584 = vunpack.c.l.b16 %v68
    %v585 = vunpack.c.l.b16 %v69
    %v586 = vunpack.c.l.b16 %v70
    %v587 = vunpack.c.l.b16 %v71
    %v588 = vunpack.c.l.b16 %v72
    %v589 = vunpack.c.l.b16 %v73
    %v590 = vunpack.c.l.b16 %v74
    %v591 = vunpack.c.l.b16 %v75
    %v592 = vunpack.c.l.b16 %v76
    %v593 = vunpack.c.l.b16 %v77
    %v594 = vunpack.c.l.b16 %v78
    %v595 = vunpack.c.l.b16 %v79
    %v596 = vunpack.c.l.b16 %v80
    %v597 = vunpack.c.l.b16 %v81
    %v598 = vunpack.c.l.b16 %v82
    %v599 = vunpack.c.l.b16 %v83
    %v600 = vunpack.c.l.b16 %v84
    %v601 = vunpack.c.l.b16 %v85
    %v602 = vunpack.c.l.b16 %v86
    %v603 = vunpack.c.l.b16 %v87
    %v604 = vunpack.c.l.b16 %v88
    %v605 = vunpack.c.l.b16 %v89
    %v606 = vunpack.c.l.b16 %v90
    %v607 = vunpack.c.l.b16 %v91
    %v608 = vunpack.c.l.b16 %v92
    %v609 = vunpack.c.l.b16 %v93
    %v610 = vunpack.c.l.b16 %v94
    %v611 = vunpack.c.l.b16 %v95
    %v612 = vunpack.c.l.b16 %v96
    %v613 = vunpack.c.l.b16 %v97
    %v614 = vunpack.c.l.b16 %v98
    %v615 = vunpack.c.l.b16 %v99
    %v616 = vunpack.c.l.b16 %v100
    %v617 = vunpack.c.l.b16 %v101
    %v618 = vunpack.c.l.b16 %v102
    %v619 = vunpack.c.l.b16 %v103
    %v620 = vunpack.c.l.b16 %v104
    %v621 = vunpack.c.l.b16 %v105
    %v622 = vunpack.c.l.b16 %v106
    %v623 = vunpack.c.l.b16 %v107
    %v624 = vunpack.c.l.b16 %v108
    %v625 = vunpack.c.l.b16 %v109
    %v626 = vunpack.c.l.b16 %v110
    %v627 = vunpack.c.l.b16 %v111
    %v628 = vunpack.c.l.b16 %v112
    %v629 = vunpack.c.l.b16 %v113
    %v630 = vunpack.c.l.b16 %v114
    %v631 = vunpack.c.l.b16 %v115
    %v632 = vunpack.c.l.b16 %v116
    %v633 = vunpack.c.l.b16 %v117
    %v634 = vunpack.c.l.b16 %v118
    %v635 = vunpack.c.l.b16 %v119
    %v636 = vunpack.c.l.b16 %v120
    %v637 = vunpack.c.l.b16 %v121
    %v638 = vunpack.c.l.b16 %v122
    %v639 = vunpack.c.l.b16 %v123
    %v640 = vunpack.c.l.b16 %v124
    %v641 = vunpack.c.l.b16 %v125
    %v642 = vunpack.c.l.b16 %v126
    %v643 = vunpack.c.l.b16 %v127
    %v644 = vunpack.c.l.b16 %v128
    %v645 = vunpack.c.l.b16 %v129
    %v646 = vunpack.c.l.b16 %v130
    %v647 = vunpack.c.l.b16 %v131
    %v648 = vunpack.c.l.b16 %v132
    %v649 = vunpack.c.l.b16 %v133
    %v650 = vunpack.c.l.b16 %v134
    %v651 = vunpack.c.l.b16 %v135
    %v652 = vunpack.c.l.b16 %v136
    %v653 = vunpack.c.l.b16 %v137
    %v654 = vunpack.c.l.b16 %v138
    %v655 = vunpack.c.l.b16 %v139
    %v656 = vunpack.c.l.b16 %v140
    %v657 = vunpack.c.l.b16 %v141
    %v658 = vunpack.c.l.b16 %v142
    %v659 = vunpack.c.l.b16 %v143
    %v660 = vunpack.c.l.b16 %v144
    %v661 = vunpack.c.l.b16 %v145
    %v662 = vunpack.c.l.b16 %v146
    %v663 = vunpack.c.l.b16 %v147
    %v664 = vunpack.c.l.b16 %v148
    %v665 = vunpack.c.l.b16 %v149
    %v666 = vunpack.c.l.b16 %v150
    %v667 = vunpack.c.l.b16 %v151
    %v668 = vunpack.c.l.b16 %v152
    %v669 = vunpack.c.l.b16 %v153
    %v670 = vunpack.c.l.b16 %v154
    %v671 = vunpack.c.l.b16 %v155
    %v672 = vunpack.c.l.b16 %v156
    %v673 = vunpack.c.l.b16 %v157
    %v674 = vunpack.c.l.b16 %v158
    %v675 = vunpack.c.l.b16 %v159
    %v676 = vunpack.c.l.b16 %v160
    %v677 = vunpack.c.l.b16 %v161
    %v678 = vunpack.c.l.b16 %v162
    %v679 = vunpack.c.l.b16 %v163
    %v680 = vunpack.c.l.b16 %v164
    %v681 = vunpack.c.l.b16 %v165
    %v682 = vunpack.c.l.b16 %v166
    %v683 = vunpack.c.l.b16 %v167
    %v684 = vunpack.c.l.b16 %v168
    %v685 = vunpack.c.l.b16 %v169
    %v686 = vunpack.c.l.b16 %v170
    %v687 = vunpack.c.l.b16 %v171
    %v688 = vunpack.c.l.b16 %v172
    %v689 = vunpack.c.l.b16 %v173
    %v690 = vunpack.c.l.b16 %v174
    %v691 = vunpack.c.l.b16 %v175
    %v692 = vunpack.c.l.b16 %v176
    %v693 = vunpack.c.l.b16 %v177
    %v694 = vunpack.c.l.b16 %v178
    %v695 = vunpack.c.l.b16 %v179
    %v696 = vunpack.c.l.b16 %v180
    %v697 = vunpack.c.l.b16 %v181
    %v698 = vunpack.c.l.b16 %v182
    %v699 = vunpack.c.l.b16 %v183
    %v700 = vunpack.c.l.b16 %v184
    %v701 = vunpack.c.l.b16 %v185
    %v702 = vunpack.c.l.b16 %v186
    %v703 = vunpack.c.l.b16 %v187
    %v704 = vunpack.c.l.b16 %v188
    %v705 = vunpack.c.l.b16 %v189
    %v706 = vunpack.c.l.b16 %v190
    %v707 = vunpack.c.l.b16 %v191
    %v708 = vunpack.c.l.b16 %v192
    %v709 = vunpack.c.l.b16 %v193
    %v710 = vunpack.c.l.b16 %v194
    %v711 = vunpack.c.l.b16 %v195
    %v712 = vunpack.c.l.b16 %v196
    %v713 = vunpack.c.l.b16 %v197
    %v714 = vunpack.c.l.b16 %v198
    %v715 = vunpack.c.l.b16 %v199
    %v716 = vunpack.c.l.b16 %v200
    %v717 = vunpack.c.l.b16 %v201
    %v718 = vunpack.c.l.b16 %v202
    %v719 = vunpack.c.l.b16 %v203
    %v720 = vunpack.c.l.b16 %v204
    %v721 = vunpack.c.l.b16 %v205
    %v722 = vunpack.c.l.b16 %v206
    %v723 = vunpack.c.l.b16 %v207
    %v724 = vunpack.c.l.b16 %v208
    %v725 = vunpack.c.l.b16 %v209
    %v726 = vunpack.c.l.b16 %v210
    %v727 = vunpack.c.l.b16 %v211
    %v728 = vunpack.c.l.b16 %v212
    %v729 = vunpack.c.l.b16 %v213
    %v730 = vunpack.c.l.b16 %v214
    %v731 = vunpack.c.l.b16 %v215
    %v732 = vunpack.c.l.b16 %v216
    %v733 = vunpack.c.l.b16 %v217
    %v734 = vunpack.c.l.b16 %v218
    %v735 = vunpack.c.l.b16 %v219
    %v736 = vunpack.c.l.b16 %v220
    %v737 = vunpack.c.l.b16 %v221
    %v738 = vunpack.c.l.b16 %v222
    %v739 = vunpack.c.l.b16 %v223
    %v740 = vunpack.c.l.b16 %v224
    %v741 = vunpack.c.l.b16 %v225
    %v742 = vunpack.c.l.b16 %v226
    %v743 = vunpack.c.l.b16 %v227
    %v744 = vunpack.c.l.b16 %v228
    %v745 = vunpack.c.l.b16 %v229
    %v746 = vunpack.c.l.b16 %v230
    %v747 = vunpack.c.l.b16 %v231
    %v748 = vunpack.c.l.b16 %v232
    %v749 = vunpack.c.l.b16 %v233
    %v750 = vunpack.c.l.b16 %v234
    %v751 = vunpack.c.l.b16 %v235
    %v752 = vunpack.c.l.b16 %v236
    %v753 = vunpack.c.l.b16 %v237
    %v754 = vunpack.c.l.b16 %v238
    %v755 = vunpack.c.l.b16 %v239
    %v756 = vunpack.c.l.b16 %v240
    %v757 = vunpack.c.l.b16 %v241
    %v758 = vunpack.c.l.b16 %v242
    %v759 = vunpack.c.l.b16 %v243
    %v760 = vunpack.c.l.b16 %v244
    %v761 = vunpack.c.l.b16 %v245
    %v762 = vunpack.c.l.b16 %v246
    %v763 = vunpack.c.l.b16 %v247
    %v764 = vunpack.c.l.b16 %v248
    %v765 = vunpack.c.l.b16 %v249
    %v766 = vunpack.c.l.b16 %v250
    %v767 = vunpack.c.l.b16 %v251
    %v768 = vunpack.c.l.b16 %v252
    %v769 = vunpack.c.l.b16 %v253
    %v770 = vunpack.c.l.b16 %v254
    %v771 = vunpack.c.l.b16 %v255
    %v772 = vunpack.c.l.b16 %v256
    %v773 = vunpack.c.l.b16 %v257
    %v774 = vunpack.c.l.b16 %v258
    %v775 = vunpack.c.l.b16 %v259
    %v776 = vunpack.c.l.b16 %v260
    %v777 = vunpack.c.l.b16 %v261
    %v778 = vunpack.c.l.b16 %v262
    %v779 = vunpack.c.l.b16 %v263
    %v780 = vunpack.c.l.b16 %v264
    %v781 = vunpack.c.l.b16 %v265
    %v782 = vunpack.c.l.b16 %v266
    %v783 = vunpack.c.l.b16 %v267
    %v784 = vunpack.c.l.b16 %v268
    %v785 = vunpack.c.l.b16 %v269
    %v786 = vunpack.c.l.b16 %v270
    %v787 = vunpack.c.l.b16 %v271
    %v788 = vpack.c.b16 %v533, %v532
    %v789 = vpack.c.b16 %v535, %v534
    %v790 = vpack.c.b16 %v537, %v536
    %v791 = vpack.c.b16 %v539, %v538
    %v792 = vpack.c.b16 %v541, %v540
    %v793 = vpack.c.b16 %v543, %v542
    %v794 = vpack.c.b16 %v545, %v544
    %v795 = vpack.c.b16 %v547, %v546
    %v796 = vpack.c.b16 %v549, %v548
    %v797 = vpack.c.b16 %v551, %v550
    %v798 = vpack.c.b16 %v553, %v552
    %v799 = vpack.c.b16 %v555, %v554
    %v800 = vpack.c.b16 %v557, %v556
    %v801 = vpack.c.b16 %v559, %v558
    %v802 = vpack.c.b16 %v561, %v560
    %v803 = vpack.c.b16 %v563, %v562
    %v804 = vpack.c.b16 %v565, %v564
    %v805 = vpack.c.b16 %v567, %v566
    %v806 = vpack.c.b16 %v569, %v568
    %v807 = vpack.c.b16 %v571, %v570
    %v808 = vpack.c.b16 %v573, %v572
    %v809 = vpack.c.b16 %v575, %v574
    %v810 = vpack.c.b16 %v577, %v576
    %v811 = vpack.c.b16 %v579, %v578
    %v812 = vpack.c.b16 %v581, %v580
    %v813 = vpack.c.b16 %v583, %v582
    %v814 = vpack.c.b16 %v585, %v584
    %v815 = vpack.c.b16 %v587, %v586
    %v816 = vpack.c.b16 %v589, %v588
    %v817 = vpack.c.b16 %v591, %v590
    %v818 = vpack.c.b16 %v593, %v592
    %v819 = vpack.c.b16 %v595, %v594
    %v820 = vpack.c.b16 %v597, %v596
    %v821 = vpack.c.b16 %v599, %v598
    %v822 = vpack.c.b16 %v601, %v600
    %v823 = vpack.c.b16 %v603, %v602
    %v824 = vpack.c.b16 %v605, %v604
    %v825 = vpack.c.b16 %v607, %v606
    %v826 = vpack.c.b16 %v609, %v608
    %v827 = vpack.c.b16 %v611, %v610
    %v828 = vpack.c.b16 %v613, %v612
    %v829 = vpack.c.b16 %v615, %v614
    %v830 = vpack.c.b16 %v617, %v616
    %v831 = vpack.c.b16 %v619, %v618
    %v832 = vpack.c.b16 %v621, %v620
    %v833 = vpack.c.b16 %v623, %v622
    %v834 = vpack.c.b16 %v625, %v624
    %v835 = vpack.c.b16 %v627, %v626
    %v836 = vpack.c.b16 %v629, %v628
    %v837 = vpack.c.b16 %v631, %v630
    %v838 = vpack.c.b16 %v633, %v632
    %v839 = vpack.c.b16 %v635, %v634
    %v840 = vpack.c.b16 %v637, %v636
    %v841 = vpack.c.b16 %v639, %v638
    %v842 = vpack.c.b16 %v641, %v640
    %v843 = vpack.c.b16 %v643, %v642
    %v844 = vpack.c.b16 %v645, %v644
    %v845 = vpack.c.b16 %v647, %v646
    %v846 = vpack.c.b16 %v649, %v648
    %v847 = vpack.c.b16 %v651, %v650
    %v848 = vpack.c.b16 %v653, %v652
    %v849 = vpack.c.b16 %v655, %v654
    %v850 = vpack.c.b16 %v657, %v656
    %v851 = vpack.c.b16 %v659, %v658
    %v852 = vpack.c.b16 %v661, %v660
    %v853 = vpack.c.b16 %v663, %v662
    %v854 = vpack.c.b16 %v665, %v664
    %v855 = vpack.c.b16 %v667, %v666
    %v856 = vpack.c.b16 %v669, %v668
    %v857 = vpack.c.b16 %v671, %v670
    %v858 = vpack.c.b16 %v673, %v672
    %v859 = vpack.c.b16 %v675, %v674
    %v860 = vpack.c.b16 %v677, %v676
    %v861 = vpack.c.b16 %v679, %v678
    %v862 = vpack.c.b16 %v681, %v680
    %v863 = vpack.c.b16 %v683, %v682
    %v864 = vpack.c.b16 %v685, %v684
    %v865 = vpack.c.b16 %v687, %v686
    %v866 = vpack.c.b16 %v689, %v688
    %v867 = vpack.c.b16 %v691, %v690
    %v868 = vpack.c.b16 %v693, %v692
    %v869 = vpack.c.b16 %v695, %v694
    %v870 = vpack.c.b16 %v697, %v696
    %v871 = vpack.c.b16 %v699, %v698
    %v872 = vpack.c.b16 %v701, %v700
    %v873 = vpack.c.b16 %v703, %v702
    %v874 = vpack.c.b16 %v705, %v704
    %v875 = vpack.c.b16 %v707, %v706
    %v876 = vpack.c.b16 %v709, %v708
    %v877 = vpack.c.b16 %v711, %v710
    %v878 = vpack.c.b16 %v713, %v712
    %v879 = vpack.c.b16 %v715, %v714
    %v880 = vpack.c.b16 %v717, %v716
    %v881 = vpack.c.b16 %v719, %v718
    %v882 = vpack.c.b16 %v721, %v720
    %v883 = vpack.c.b16 %v723, %v722
    %v884 = vpack.c.b16 %v725, %v724
    %v885 = vpack.c.b16 %v727, %v726
    %v886 = vpack.c.b16 %v729, %v728
    %v887 = vpack.c.b16 %v731, %v730
    %v888 = vpack.c.b16 %v733, %v732
    %v889 = vpack.c.b16 %v735, %v734
    %v890 = vpack.c.b16 %v737, %v736
    %v891 = vpack.c.b16 %v739, %v738
    %v892 = vpack.c.b16 %v741, %v740
    %v893 = vpack.c.b16 %v743, %v742
    %v894 = vpack.c.b16 %v745, %v744
    %v895 = vpack.c.b16 %v747, %v746
    %v896 = vpack.c.b16 %v749, %v748
    %v897 = vpack.c.b16 %v751, %v750
    %v898 = vpack.c.b16 %v753, %v752
    %v899 = vpack.c.b16 %v755, %v754
    %v900 = vpack.c.b16 %v757, %v756
    %v901 = vpack.c.b16 %v759, %v758
    %v902 = vpack.c.b16 %v761, %v760
    %v903 = vpack.c.b16 %v763, %v762
    %v904 = vpack.c.b16 %v765, %v764
    %v905 = vpack.c.b16 %v767, %v766
    %v906 = vpack.c.b16 %v769, %v768
    %v907 = vpack.c.b16 %v771, %v770
    %v908 = vpack.c.b16 %v773, %v772
    %v909 = vpack.c.b16 %v775, %v774
    %v910 = vpack.c.b16 %v777, %v776
    %v911 = vpack.c.b16 %v779, %v778
    %v912 = vpack.c.b16 %v781, %v780
    %v913 = vpack.c.b16 %v783, %v782
    %v914 = vpack.c.b16 %v785, %v784
    %v915 = vpack.c.b16 %v787, %v786
    %v920 = vunpack.c.l.b16 %v272
    %v921 = vunpack.c.l.b16 %v273
    %v922 = vunpack.c.l.b16 %v274
    %v923 = vunpack.c.l.b16 %v275
    %v924 = vpack.c.b16 %v921, %v920
    %v925 = vpack.c.b16 %v923, %v922
    %vm928 = vcmask 261120
    %v930 = vsel %vm928, %v788, 0
    %v933 = vsel %vm928, %v789, 0
    %v936 = vsel %vm928, %v790, 0
    %v939 = vsel %vm928, %v791, 0
    %v942 = vsel %vm928, %v792, 0
    %v945 = vsel %vm928, %v793, 0
    %v948 = vsel %vm928, %v794, 0
    %v951 = vsel %vm928, %v795, 0
    %v954 = vsel %vm928, %v796, 0
    %v957 = vsel %vm928, %v797, 0
    %v960 = vsel %vm928, %v798, 0
    %v963 = vsel %vm928, %v799, 0
    %v966 = vsel %vm928, %v800, 0
    %v969 = vsel %vm928, %v801, 0
    %v972 = vsel %vm928, %v802, 0
    %v975 = vsel %vm928, %v803, 0
    %v978 = vsel %vm928, %v804, 0
    %v981 = vsel %vm928, %v805, 0
    %v984 = vsel %vm928, %v806, 0
    %v987 = vsel %vm928, %v807, 0
    %v990 = vsel %vm928, %v808, 0
    %v993 = vsel %vm928, %v809, 0
    %v996 = vsel %vm928, %v810, 0
    %v999 = vsel %vm928, %v811, 0
    %v1002 = vsel %vm928, %v812, 0
    %v1005 = vsel %vm928, %v813, 0
    %v1008 = vsel %vm928, %v814, 0
    %v1011 = vsel %vm928, %v815, 0
    %v1014 = vsel %vm928, %v816, 0
    %v1017 = vsel %vm928, %v817, 0
    %v1020 = vsel %vm928, %v818, 0
    %v1023 = vsel %vm928, %v819, 0
    %v1026 = vsel %vm928, %v820, 0
    %v1029 = vsel %vm928, %v821, 0
    %v1032 = vsel %vm928, %v822, 0
    %v1035 = vsel %vm928, %v823, 0
    %v1038 = vsel %vm928, %v824, 0
    %v1041 = vsel %vm928, %v825, 0
    %v1044 = vsel %vm928, %v826, 0
    %v1047 = vsel %vm928, %v827, 0
    %v1050 = vsel %vm928, %v828, 0
    %v1053 = vsel %vm928, %v829, 0
    %v1056 = vsel %vm928, %v830, 0
    %v1059 = vsel %vm928, %v831, 0
    %v1062 = vsel %vm928, %v832, 0
    %v1065 = vsel %vm928, %v833, 0
    %v1068 = vsel %vm928, %v834, 0
    %v1071 = vsel %vm928, %v835, 0
    %v1074 = vsel %vm928, %v836, 0
    %v1077 = vsel %vm928, %v837, 0
    %v1080 = vsel %vm928, %v838, 0
    %v1083 = vsel %vm928, %v839, 0
    %v1086 = vsel %vm928, %v840, 0
    %v1089 = vsel %vm928, %v841, 0
    %v1092 = vsel %vm928, %v842, 0
    %v1095 = vsel %vm928, %v843, 0
    %v1098 = vsel %vm928, %v844, 0
    %v1101 = vsel %vm928, %v845, 0
    %v1104 = vsel %vm928, %v846, 0
    %v1107 = vsel %vm928, %v847, 0
    %v1110 = vsel %vm928, %v848, 0
    %v1113 = vsel %vm928, %v849, 0
    %v1116 = vsel %vm928, %v850, 0
    %v1119 = vsel %vm928, %v851, 0
    %v1122 = vsel %vm928, %v852, 0
    %v1125 = vsel %vm928, %v853, 0
    %v1128 = vsel %vm928, %v854, 0
    %v1131 = vsel %vm928, %v855, 0
    %v1134 = vsel %vm928, %v856, 0
    %v1137 = vsel %vm928, %v857, 0
    %v1140 = vsel %vm928, %v858, 0
    %v1143 = vsel %vm928, %v859, 0
    %v1146 = vsel %vm928, %v860, 0
    %v1149 = vsel %vm928, %v861, 0
    %v1152 = vsel %vm928, %v862, 0
    %v1155 = vsel %vm928, %v863, 0
    %v1158 = vsel %vm928, %v864, 0
    %v1161 = vsel %vm928, %v865, 0
    %v1164 = vsel %vm928, %v866, 0
    %v1167 = vsel %vm928, %v867, 0
    %v1170 = vsel %vm928, %v868, 0
    %v1173 = vsel %vm928, %v869, 0
    %v1176 = vsel %vm928, %v870, 0
    %v1179 = vsel %vm928, %v871, 0
    %v1182 = vsel %vm928, %v872, 0
    %v1185 = vsel %vm928, %v873, 0
    %v1188 = vsel %vm928, %v874, 0
    %v1191 = vsel %vm928, %v875, 0
    %v1194 = vsel %vm928, %v876, 0
    %v1197 = vsel %vm928, %v877, 0
    %v1200 = vsel %vm928, %v878, 0
    %v1203 = vsel %vm928, %v879, 0
    %v1206 = vsel %vm928, %v880, 0
    %v1209 = vsel %vm928, %v881, 0
    %v1212 = vsel %vm928, %v882, 0
    %v1215 = vsel %vm928, %v883, 0
    %v1218 = vsel %vm928, %v884, 0
    %v1221 = vsel %vm928, %v885, 0
    %v1224 = vsel %vm928, %v886, 0
    %v1227 = vsel %vm928, %v887, 0
    %v1230 = vsel %vm928, %v888, 0
    %v1233 = vsel %vm928, %v889, 0
    %v1236 = vsel %vm928, %v890, 0
    %v1239 = vsel %vm928, %v891, 0
    %v1242 = vsel %vm928, %v892, 0
    %v1245 = vsel %vm928, %v893, 0
    %v1248 = vsel %vm928, %v894, 0
    %v1251 = vsel %vm928, %v895, 0
    %v1254 = vsel %vm928, %v896, 0
    %v1257 = vsel %vm928, %v897, 0
    %v1260 = vsel %vm928, %v898, 0
    %v1263 = vsel %vm928, %v899, 0
    %v1266 = vsel %vm928, %v900, 0
    %v1269 = vsel %vm928, %v901, 0
    %v1272 = vsel %vm928, %v902, 0
    %v1275 = vsel %vm928, %v903, 0
    %v1278 = vsel %vm928, %v904, 0
    %v1281 = vsel %vm928, %v905, 0
    %v1284 = vsel %vm928, %v906, 0
    %v1287 = vsel %vm928, %v907, 0
    %v1290 = vsel %vm928, %v908, 0
    %v1293 = vsel %vm928, %v909, 0
    %v1296 = vsel %vm928, %v910, 0
    %v1299 = vsel %vm928, %v911, 0
    %v1302 = vsel %vm928, %v912, 0
    %v1305 = vsel %vm928, %v913, 0
    %v1308 = vsel %vm928, %v914, 0
    %v1311 = vsel %vm928, %v915, 0
    %1313 = vmatpush.bf16.msra.mxu0 0
    %1314 = vmatpush.bf16.msra.mxu0 0
    %1315 = vmatpush.bf16.msra.mxu0 0
    %1316 = vmatpush.bf16.msra.mxu0 0
    %1317 = vmatpush.bf16.msra.mxu0 0
    %1318 = vmatpush.bf16.msra.mxu0 0
    %1319 = vmatpush.bf16.msra.mxu0 %v925
    %1320 = vmatpush.bf16.msra.mxu0 %v924
    %1321 = vmatmul.bf16.gmra.mxu0 %v930
    %v1322 = vpop.f32.mrf.mxu0
    %v1323 = vadd.f32 0.0, %v1322
    %v1324 = vpop.f32.mrf.mxu0
    %v1325 = vadd.f32 0.0, %v1324
    %1326 = vmatmul.bf16.gmra.mxu0 %v933
    %v1327 = vpop.f32.mrf.mxu0
    %v1328 = vadd.f32 0.0, %v1327
    %v1329 = vpop.f32.mrf.mxu0
    %v1330 = vadd.f32 0.0, %v1329
    %1331 = vmatmul.bf16.gmra.mxu0 %v936
    %v1332 = vpop.f32.mrf.mxu0
    %v1333 = vadd.f32 0.0, %v1332
    %v1334 = vpop.f32.mrf.mxu0
    %v1335 = vadd.f32 0.0, %v1334
    %1336 = vmatmul.bf16.gmra.mxu0 %v939
    %v1337 = vpop.f32.mrf.mxu0
    %v1338 = vadd.f32 0.0, %v1337
    %v1339 = vpop.f32.mrf.mxu0
    %v1340 = vadd.f32 0.0, %v1339
    %1341 = vmatmul.bf16.gmra.mxu0 %v942
    %v1342 = vpop.f32.mrf.mxu0
    %v1343 = vadd.f32 0.0, %v1342
    %v1344 = vpop.f32.mrf.mxu0
    %v1345 = vadd.f32 0.0, %v1344
    %1346 = vmatmul.bf16.gmra.mxu0 %v945
    %v1347 = vpop.f32.mrf.mxu0
    %v1348 = vadd.f32 0.0, %v1347
    %v1349 = vpop.f32.mrf.mxu0
    %v1350 = vadd.f32 0.0, %v1349
    %1351 = vmatmul.bf16.gmra.mxu0 %v948
    %v1352 = vpop.f32.mrf.mxu0
    %v1353 = vadd.f32 0.0, %v1352
    %v1354 = vpop.f32.mrf.mxu0
    %v1355 = vadd.f32 0.0, %v1354
    %1356 = vmatmul.bf16.gmra.mxu0 %v951
    %v1357 = vpop.f32.mrf.mxu0
    %v1358 = vadd.f32 0.0, %v1357
    %v1359 = vpop.f32.mrf.mxu0
    %v1360 = vadd.f32 0.0, %v1359
    %1361 = vmatmul.bf16.gmra.mxu0 %v954
    %v1362 = vpop.f32.mrf.mxu0
    %v1363 = vadd.f32 0.0, %v1362
    %v1364 = vpop.f32.mrf.mxu0
    %v1365 = vadd.f32 0.0, %v1364
    %1366 = vmatmul.bf16.gmra.mxu0 %v957
    %v1367 = vpop.f32.mrf.mxu0
    %v1368 = vadd.f32 0.0, %v1367
    %v1369 = vpop.f32.mrf.mxu0
    %v1370 = vadd.f32 0.0, %v1369
    %1371 = vmatmul.bf16.gmra.mxu0 %v960
    %v1372 = vpop.f32.mrf.mxu0
    %v1373 = vadd.f32 0.0, %v1372
    %v1374 = vpop.f32.mrf.mxu0
    %v1375 = vadd.f32 0.0, %v1374
    %1376 = vmatmul.bf16.gmra.mxu0 %v963
    %v1377 = vpop.f32.mrf.mxu0
    %v1378 = vadd.f32 0.0, %v1377
    %v1379 = vpop.f32.mrf.mxu0
    %v1380 = vadd.f32 0.0, %v1379
    %1381 = vmatmul.bf16.gmra.mxu0 %v966
    %v1382 = vpop.f32.mrf.mxu0
    %v1383 = vadd.f32 0.0, %v1382
    %v1384 = vpop.f32.mrf.mxu0
    %v1385 = vadd.f32 0.0, %v1384
    %1386 = vmatmul.bf16.gmra.mxu0 %v969
    %v1387 = vpop.f32.mrf.mxu0
    %v1388 = vadd.f32 0.0, %v1387
    %v1389 = vpop.f32.mrf.mxu0
    %v1390 = vadd.f32 0.0, %v1389
    %1391 = vmatmul.bf16.gmra.mxu0 %v972
    %v1392 = vpop.f32.mrf.mxu0
    %v1393 = vadd.f32 0.0, %v1392
    %v1394 = vpop.f32.mrf.mxu0
    %v1395 = vadd.f32 0.0, %v1394
    %1396 = vmatmul.bf16.gmra.mxu0 %v975
    %v1397 = vpop.f32.mrf.mxu0
    %v1398 = vadd.f32 0.0, %v1397
    %v1399 = vpop.f32.mrf.mxu0
    %v1400 = vadd.f32 0.0, %v1399
    %1401 = vmatmul.bf16.gmra.mxu0 %v978
    %v1402 = vpop.f32.mrf.mxu0
    %v1403 = vadd.f32 0.0, %v1402
    %v1404 = vpop.f32.mrf.mxu0
    %v1405 = vadd.f32 0.0, %v1404
    %1406 = vmatmul.bf16.gmra.mxu0 %v981
    %v1407 = vpop.f32.mrf.mxu0
    %v1408 = vadd.f32 0.0, %v1407
    %v1409 = vpop.f32.mrf.mxu0
    %v1410 = vadd.f32 0.0, %v1409
    %1411 = vmatmul.bf16.gmra.mxu0 %v984
    %v1412 = vpop.f32.mrf.mxu0
    %v1413 = vadd.f32 0.0, %v1412
    %v1414 = vpop.f32.mrf.mxu0
    %v1415 = vadd.f32 0.0, %v1414
    %1416 = vmatmul.bf16.gmra.mxu0 %v987
    %v1417 = vpop.f32.mrf.mxu0
    %v1418 = vadd.f32 0.0, %v1417
    %v1419 = vpop.f32.mrf.mxu0
    %v1420 = vadd.f32 0.0, %v1419
    %1421 = vmatmul.bf16.gmra.mxu0 %v990
    %v1422 = vpop.f32.mrf.mxu0
    %v1423 = vadd.f32 0.0, %v1422
    %v1424 = vpop.f32.mrf.mxu0
    %v1425 = vadd.f32 0.0, %v1424
    %1426 = vmatmul.bf16.gmra.mxu0 %v993
    %v1427 = vpop.f32.mrf.mxu0
    %v1428 = vadd.f32 0.0, %v1427
    %v1429 = vpop.f32.mrf.mxu0
    %v1430 = vadd.f32 0.0, %v1429
    %1431 = vmatmul.bf16.gmra.mxu0 %v996
    %v1432 = vpop.f32.mrf.mxu0
    %v1433 = vadd.f32 0.0, %v1432
    %v1434 = vpop.f32.mrf.mxu0
    %v1435 = vadd.f32 0.0, %v1434
    %1436 = vmatmul.bf16.gmra.mxu0 %v999
    %v1437 = vpop.f32.mrf.mxu0
    %v1438 = vadd.f32 0.0, %v1437
    %v1439 = vpop.f32.mrf.mxu0
    %v1440 = vadd.f32 0.0, %v1439
    %1441 = vmatmul.bf16.gmra.mxu0 %v1002
    %v1442 = vpop.f32.mrf.mxu0
    %v1443 = vadd.f32 0.0, %v1442
    %v1444 = vpop.f32.mrf.mxu0
    %v1445 = vadd.f32 0.0, %v1444
    %1446 = vmatmul.bf16.gmra.mxu0 %v1005
    %v1447 = vpop.f32.mrf.mxu0
    %v1448 = vadd.f32 0.0, %v1447
    %v1449 = vpop.f32.mrf.mxu0
    %v1450 = vadd.f32 0.0, %v1449
    %1451 = vmatmul.bf16.gmra.mxu0 %v1008
    %v1452 = vpop.f32.mrf.mxu0
    %v1453 = vadd.f32 0.0, %v1452
    %v1454 = vpop.f32.mrf.mxu0
    %v1455 = vadd.f32 0.0, %v1454
    %1456 = vmatmul.bf16.gmra.mxu0 %v1011
    %v1457 = vpop.f32.mrf.mxu0
    %v1458 = vadd.f32 0.0, %v1457
    %v1459 = vpop.f32.mrf.mxu0
    %v1460 = vadd.f32 0.0, %v1459
    %1461 = vmatmul.bf16.gmra.mxu0 %v1014
    %v1462 = vpop.f32.mrf.mxu0
    %v1463 = vadd.f32 0.0, %v1462
    %v1464 = vpop.f32.mrf.mxu0
    %v1465 = vadd.f32 0.0, %v1464
    %1466 = vmatmul.bf16.gmra.mxu0 %v1017
    %v1467 = vpop.f32.mrf.mxu0
    %v1468 = vadd.f32 0.0, %v1467
    %v1469 = vpop.f32.mrf.mxu0
    %v1470 = vadd.f32 0.0, %v1469
    %1471 = vmatmul.bf16.gmra.mxu0 %v1020
    %v1472 = vpop.f32.mrf.mxu0
    %v1473 = vadd.f32 0.0, %v1472
    %v1474 = vpop.f32.mrf.mxu0
    %v1475 = vadd.f32 0.0, %v1474
    %1476 = vmatmul.bf16.gmra.mxu0 %v1023
    %v1477 = vpop.f32.mrf.mxu0
    %v1478 = vadd.f32 0.0, %v1477
    %v1479 = vpop.f32.mrf.mxu0
    %v1480 = vadd.f32 0.0, %v1479
    %1481 = vmatmul.bf16.gmra.mxu0 %v1026
    %v1482 = vpop.f32.mrf.mxu0
    %v1483 = vadd.f32 0.0, %v1482
    %v1484 = vpop.f32.mrf.mxu0
    %v1485 = vadd.f32 0.0, %v1484
    %1486 = vmatmul.bf16.gmra.mxu0 %v1029
    %v1487 = vpop.f32.mrf.mxu0
    %v1488 = vadd.f32 0.0, %v1487
    %v1489 = vpop.f32.mrf.mxu0
    %v1490 = vadd.f32 0.0, %v1489
    %1491 = vmatmul.bf16.gmra.mxu0 %v1032
    %v1492 = vpop.f32.mrf.mxu0
    %v1493 = vadd.f32 0.0, %v1492
    %v1494 = vpop.f32.mrf.mxu0
    %v1495 = vadd.f32 0.0, %v1494
    %1496 = vmatmul.bf16.gmra.mxu0 %v1035
    %v1497 = vpop.f32.mrf.mxu0
    %v1498 = vadd.f32 0.0, %v1497
    %v1499 = vpop.f32.mrf.mxu0
    %v1500 = vadd.f32 0.0, %v1499
    %1501 = vmatmul.bf16.gmra.mxu0 %v1038
    %v1502 = vpop.f32.mrf.mxu0
    %v1503 = vadd.f32 0.0, %v1502
    %v1504 = vpop.f32.mrf.mxu0
    %v1505 = vadd.f32 0.0, %v1504
    %1506 = vmatmul.bf16.gmra.mxu0 %v1041
    %v1507 = vpop.f32.mrf.mxu0
    %v1508 = vadd.f32 0.0, %v1507
    %v1509 = vpop.f32.mrf.mxu0
    %v1510 = vadd.f32 0.0, %v1509
    %1511 = vmatmul.bf16.gmra.mxu0 %v1044
    %v1512 = vpop.f32.mrf.mxu0
    %v1513 = vadd.f32 0.0, %v1512
    %v1514 = vpop.f32.mrf.mxu0
    %v1515 = vadd.f32 0.0, %v1514
    %1516 = vmatmul.bf16.gmra.mxu0 %v1047
    %v1517 = vpop.f32.mrf.mxu0
    %v1518 = vadd.f32 0.0, %v1517
    %v1519 = vpop.f32.mrf.mxu0
    %v1520 = vadd.f32 0.0, %v1519
    %1521 = vmatmul.bf16.gmra.mxu0 %v1050
    %v1522 = vpop.f32.mrf.mxu0
    %v1523 = vadd.f32 0.0, %v1522
    %v1524 = vpop.f32.mrf.mxu0
    %v1525 = vadd.f32 0.0, %v1524
    %1526 = vmatmul.bf16.gmra.mxu0 %v1053
    %v1527 = vpop.f32.mrf.mxu0
    %v1528 = vadd.f32 0.0, %v1527
    %v1529 = vpop.f32.mrf.mxu0
    %v1530 = vadd.f32 0.0, %v1529
    %1531 = vmatmul.bf16.gmra.mxu0 %v1056
    %v1532 = vpop.f32.mrf.mxu0
    %v1533 = vadd.f32 0.0, %v1532
    %v1534 = vpop.f32.mrf.mxu0
    %v1535 = vadd.f32 0.0, %v1534
    %1536 = vmatmul.bf16.gmra.mxu0 %v1059
    %v1537 = vpop.f32.mrf.mxu0
    %v1538 = vadd.f32 0.0, %v1537
    %v1539 = vpop.f32.mrf.mxu0
    %v1540 = vadd.f32 0.0, %v1539
    %1541 = vmatmul.bf16.gmra.mxu0 %v1062
    %v1542 = vpop.f32.mrf.mxu0
    %v1543 = vadd.f32 0.0, %v1542
    %v1544 = vpop.f32.mrf.mxu0
    %v1545 = vadd.f32 0.0, %v1544
    %1546 = vmatmul.bf16.gmra.mxu0 %v1065
    %v1547 = vpop.f32.mrf.mxu0
    %v1548 = vadd.f32 0.0, %v1547
    %v1549 = vpop.f32.mrf.mxu0
    %v1550 = vadd.f32 0.0, %v1549
    %1551 = vmatmul.bf16.gmra.mxu0 %v1068
    %v1552 = vpop.f32.mrf.mxu0
    %v1553 = vadd.f32 0.0, %v1552
    %v1554 = vpop.f32.mrf.mxu0
    %v1555 = vadd.f32 0.0, %v1554
    %1556 = vmatmul.bf16.gmra.mxu0 %v1071
    %v1557 = vpop.f32.mrf.mxu0
    %v1558 = vadd.f32 0.0, %v1557
    %v1559 = vpop.f32.mrf.mxu0
    %v1560 = vadd.f32 0.0, %v1559
    %1561 = vmatmul.bf16.gmra.mxu0 %v1074
    %v1562 = vpop.f32.mrf.mxu0
    %v1563 = vadd.f32 0.0, %v1562
    %v1564 = vpop.f32.mrf.mxu0
    %v1565 = vadd.f32 0.0, %v1564
    %1566 = vmatmul.bf16.gmra.mxu0 %v1077
    %v1567 = vpop.f32.mrf.mxu0
    %v1568 = vadd.f32 0.0, %v1567
    %v1569 = vpop.f32.mrf.mxu0
    %v1570 = vadd.f32 0.0, %v1569
    %1571 = vmatmul.bf16.gmra.mxu0 %v1080
    %v1572 = vpop.f32.mrf.mxu0
    %v1573 = vadd.f32 0.0, %v1572
    %v1574 = vpop.f32.mrf.mxu0
    %v1575 = vadd.f32 0.0, %v1574
    %1576 = vmatmul.bf16.gmra.mxu0 %v1083
    %v1577 = vpop.f32.mrf.mxu0
    %v1578 = vadd.f32 0.0, %v1577
    %v1579 = vpop.f32.mrf.mxu0
    %v1580 = vadd.f32 0.0, %v1579
    %1581 = vmatmul.bf16.gmra.mxu0 %v1086
    %v1582 = vpop.f32.mrf.mxu0
    %v1583 = vadd.f32 0.0, %v1582
    %v1584 = vpop.f32.mrf.mxu0
    %v1585 = vadd.f32 0.0, %v1584
    %1586 = vmatmul.bf16.gmra.mxu0 %v1089
    %v1587 = vpop.f32.mrf.mxu0
    %v1588 = vadd.f32 0.0, %v1587
    %v1589 = vpop.f32.mrf.mxu0
    %v1590 = vadd.f32 0.0, %v1589
    %1591 = vmatmul.bf16.gmra.mxu0 %v1092
    %v1592 = vpop.f32.mrf.mxu0
    %v1593 = vadd.f32 0.0, %v1592
    %v1594 = vpop.f32.mrf.mxu0
    %v1595 = vadd.f32 0.0, %v1594
    %1596 = vmatmul.bf16.gmra.mxu0 %v1095
    %v1597 = vpop.f32.mrf.mxu0
    %v1598 = vadd.f32 0.0, %v1597
    %v1599 = vpop.f32.mrf.mxu0
    %v1600 = vadd.f32 0.0, %v1599
    %1601 = vmatmul.bf16.gmra.mxu0 %v1098
    %v1602 = vpop.f32.mrf.mxu0
    %v1603 = vadd.f32 0.0, %v1602
    %v1604 = vpop.f32.mrf.mxu0
    %v1605 = vadd.f32 0.0, %v1604
    %1606 = vmatmul.bf16.gmra.mxu0 %v1101
    %v1607 = vpop.f32.mrf.mxu0
    %v1608 = vadd.f32 0.0, %v1607
    %v1609 = vpop.f32.mrf.mxu0
    %v1610 = vadd.f32 0.0, %v1609
    %1611 = vmatmul.bf16.gmra.mxu0 %v1104
    %v1612 = vpop.f32.mrf.mxu0
    %v1613 = vadd.f32 0.0, %v1612
    %v1614 = vpop.f32.mrf.mxu0
    %v1615 = vadd.f32 0.0, %v1614
    %1616 = vmatmul.bf16.gmra.mxu0 %v1107
    %v1617 = vpop.f32.mrf.mxu0
    %v1618 = vadd.f32 0.0, %v1617
    %v1619 = vpop.f32.mrf.mxu0
    %v1620 = vadd.f32 0.0, %v1619
    %1621 = vmatmul.bf16.gmra.mxu0 %v1110
    %v1622 = vpop.f32.mrf.mxu0
    %v1623 = vadd.f32 0.0, %v1622
    %v1624 = vpop.f32.mrf.mxu0
    %v1625 = vadd.f32 0.0, %v1624
    %1626 = vmatmul.bf16.gmra.mxu0 %v1113
    %v1627 = vpop.f32.mrf.mxu0
    %v1628 = vadd.f32 0.0, %v1627
    %v1629 = vpop.f32.mrf.mxu0
    %v1630 = vadd.f32 0.0, %v1629
    %1631 = vmatmul.bf16.gmra.mxu0 %v1116
    %v1632 = vpop.f32.mrf.mxu0
    %v1633 = vadd.f32 0.0, %v1632
    %v1634 = vpop.f32.mrf.mxu0
    %v1635 = vadd.f32 0.0, %v1634
    %1636 = vmatmul.bf16.gmra.mxu0 %v1119
    %v1637 = vpop.f32.mrf.mxu0
    %v1638 = vadd.f32 0.0, %v1637
    %v1639 = vpop.f32.mrf.mxu0
    %v1640 = vadd.f32 0.0, %v1639
    %1641 = vmatmul.bf16.gmra.mxu0 %v1122
    %v1642 = vpop.f32.mrf.mxu0
    %v1643 = vadd.f32 0.0, %v1642
    %v1644 = vpop.f32.mrf.mxu0
    %v1645 = vadd.f32 0.0, %v1644
    %1646 = vmatmul.bf16.gmra.mxu0 %v1125
    %v1647 = vpop.f32.mrf.mxu0
    %v1648 = vadd.f32 0.0, %v1647
    %v1649 = vpop.f32.mrf.mxu0
    %v1650 = vadd.f32 0.0, %v1649
    %1651 = vmatmul.bf16.gmra.mxu0 %v1128
    %v1652 = vpop.f32.mrf.mxu0
    %v1653 = vadd.f32 0.0, %v1652
    %v1654 = vpop.f32.mrf.mxu0
    %v1655 = vadd.f32 0.0, %v1654
    %1656 = vmatmul.bf16.gmra.mxu0 %v1131
    %v1657 = vpop.f32.mrf.mxu0
    %v1658 = vadd.f32 0.0, %v1657
    %v1659 = vpop.f32.mrf.mxu0
    %v1660 = vadd.f32 0.0, %v1659
    %1661 = vmatmul.bf16.gmra.mxu0 %v1134
    %v1662 = vpop.f32.mrf.mxu0
    %v1663 = vadd.f32 0.0, %v1662
    %v1664 = vpop.f32.mrf.mxu0
    %v1665 = vadd.f32 0.0, %v1664
    %1666 = vmatmul.bf16.gmra.mxu0 %v1137
    %v1667 = vpop.f32.mrf.mxu0
    %v1668 = vadd.f32 0.0, %v1667
    %v1669 = vpop.f32.mrf.mxu0
    %v1670 = vadd.f32 0.0, %v1669
    %1671 = vmatmul.bf16.gmra.mxu0 %v1140
    %v1672 = vpop.f32.mrf.mxu0
    %v1673 = vadd.f32 0.0, %v1672
    %v1674 = vpop.f32.mrf.mxu0
    %v1675 = vadd.f32 0.0, %v1674
    %1676 = vmatmul.bf16.gmra.mxu0 %v1143
    %v1677 = vpop.f32.mrf.mxu0
    %v1678 = vadd.f32 0.0, %v1677
    %v1679 = vpop.f32.mrf.mxu0
    %v1680 = vadd.f32 0.0, %v1679
    %1681 = vmatmul.bf16.gmra.mxu0 %v1146
    %v1682 = vpop.f32.mrf.mxu0
    %v1683 = vadd.f32 0.0, %v1682
    %v1684 = vpop.f32.mrf.mxu0
    %v1685 = vadd.f32 0.0, %v1684
    %1686 = vmatmul.bf16.gmra.mxu0 %v1149
    %v1687 = vpop.f32.mrf.mxu0
    %v1688 = vadd.f32 0.0, %v1687
    %v1689 = vpop.f32.mrf.mxu0
    %v1690 = vadd.f32 0.0, %v1689
    %1691 = vmatmul.bf16.gmra.mxu0 %v1152
    %v1692 = vpop.f32.mrf.mxu0
    %v1693 = vadd.f32 0.0, %v1692
    %v1694 = vpop.f32.mrf.mxu0
    %v1695 = vadd.f32 0.0, %v1694
    %1696 = vmatmul.bf16.gmra.mxu0 %v1155
    %v1697 = vpop.f32.mrf.mxu0
    %v1698 = vadd.f32 0.0, %v1697
    %v1699 = vpop.f32.mrf.mxu0
    %v1700 = vadd.f32 0.0, %v1699
    %1701 = vmatmul.bf16.gmra.mxu0 %v1158
    %v1702 = vpop.f32.mrf.mxu0
    %v1703 = vadd.f32 0.0, %v1702
    %v1704 = vpop.f32.mrf.mxu0
    %v1705 = vadd.f32 0.0, %v1704
    %1706 = vmatmul.bf16.gmra.mxu0 %v1161
    %v1707 = vpop.f32.mrf.mxu0
    %v1708 = vadd.f32 0.0, %v1707
    %v1709 = vpop.f32.mrf.mxu0
    %v1710 = vadd.f32 0.0, %v1709
    %1711 = vmatmul.bf16.gmra.mxu0 %v1164
    %v1712 = vpop.f32.mrf.mxu0
    %v1713 = vadd.f32 0.0, %v1712
    %v1714 = vpop.f32.mrf.mxu0
    %v1715 = vadd.f32 0.0, %v1714
    %1716 = vmatmul.bf16.gmra.mxu0 %v1167
    %v1717 = vpop.f32.mrf.mxu0
    %v1718 = vadd.f32 0.0, %v1717
    %v1719 = vpop.f32.mrf.mxu0
    %v1720 = vadd.f32 0.0, %v1719
    %1721 = vmatmul.bf16.gmra.mxu0 %v1170
    %v1722 = vpop.f32.mrf.mxu0
    %v1723 = vadd.f32 0.0, %v1722
    %v1724 = vpop.f32.mrf.mxu0
    %v1725 = vadd.f32 0.0, %v1724
    %1726 = vmatmul.bf16.gmra.mxu0 %v1173
    %v1727 = vpop.f32.mrf.mxu0
    %v1728 = vadd.f32 0.0, %v1727
    %v1729 = vpop.f32.mrf.mxu0
    %v1730 = vadd.f32 0.0, %v1729
    %1731 = vmatmul.bf16.gmra.mxu0 %v1176
    %v1732 = vpop.f32.mrf.mxu0
    %v1733 = vadd.f32 0.0, %v1732
    %v1734 = vpop.f32.mrf.mxu0
    %v1735 = vadd.f32 0.0, %v1734
    %1736 = vmatmul.bf16.gmra.mxu0 %v1179
    %v1737 = vpop.f32.mrf.mxu0
    %v1738 = vadd.f32 0.0, %v1737
    %v1739 = vpop.f32.mrf.mxu0
    %v1740 = vadd.f32 0.0, %v1739
    %1741 = vmatmul.bf16.gmra.mxu0 %v1182
    %v1742 = vpop.f32.mrf.mxu0
    %v1743 = vadd.f32 0.0, %v1742
    %v1744 = vpop.f32.mrf.mxu0
    %v1745 = vadd.f32 0.0, %v1744
    %1746 = vmatmul.bf16.gmra.mxu0 %v1185
    %v1747 = vpop.f32.mrf.mxu0
    %v1748 = vadd.f32 0.0, %v1747
    %v1749 = vpop.f32.mrf.mxu0
    %v1750 = vadd.f32 0.0, %v1749
    %1751 = vmatmul.bf16.gmra.mxu0 %v1188
    %v1752 = vpop.f32.mrf.mxu0
    %v1753 = vadd.f32 0.0, %v1752
    %v1754 = vpop.f32.mrf.mxu0
    %v1755 = vadd.f32 0.0, %v1754
    %1756 = vmatmul.bf16.gmra.mxu0 %v1191
    %v1757 = vpop.f32.mrf.mxu0
    %v1758 = vadd.f32 0.0, %v1757
    %v1759 = vpop.f32.mrf.mxu0
    %v1760 = vadd.f32 0.0, %v1759
    %1761 = vmatmul.bf16.gmra.mxu0 %v1194
    %v1762 = vpop.f32.mrf.mxu0
    %v1763 = vadd.f32 0.0, %v1762
    %v1764 = vpop.f32.mrf.mxu0
    %v1765 = vadd.f32 0.0, %v1764
    %1766 = vmatmul.bf16.gmra.mxu0 %v1197
    %v1767 = vpop.f32.mrf.mxu0
    %v1768 = vadd.f32 0.0, %v1767
    %v1769 = vpop.f32.mrf.mxu0
    %v1770 = vadd.f32 0.0, %v1769
    %1771 = vmatmul.bf16.gmra.mxu0 %v1200
    %v1772 = vpop.f32.mrf.mxu0
    %v1773 = vadd.f32 0.0, %v1772
    %v1774 = vpop.f32.mrf.mxu0
    %v1775 = vadd.f32 0.0, %v1774
    %1776 = vmatmul.bf16.gmra.mxu0 %v1203
    %v1777 = vpop.f32.mrf.mxu0
    %v1778 = vadd.f32 0.0, %v1777
    %v1779 = vpop.f32.mrf.mxu0
    %v1780 = vadd.f32 0.0, %v1779
    %1781 = vmatmul.bf16.gmra.mxu0 %v1206
    %v1782 = vpop.f32.mrf.mxu0
    %v1783 = vadd.f32 0.0, %v1782
    %v1784 = vpop.f32.mrf.mxu0
    %v1785 = vadd.f32 0.0, %v1784
    %1786 = vmatmul.bf16.gmra.mxu0 %v1209
    %v1787 = vpop.f32.mrf.mxu0
    %v1788 = vadd.f32 0.0, %v1787
    %v1789 = vpop.f32.mrf.mxu0
    %v1790 = vadd.f32 0.0, %v1789
    %1791 = vmatmul.bf16.gmra.mxu0 %v1212
    %v1792 = vpop.f32.mrf.mxu0
    %v1793 = vadd.f32 0.0, %v1792
    %v1794 = vpop.f32.mrf.mxu0
    %v1795 = vadd.f32 0.0, %v1794
    %1796 = vmatmul.bf16.gmra.mxu0 %v1215
    %v1797 = vpop.f32.mrf.mxu0
    %v1798 = vadd.f32 0.0, %v1797
    %v1799 = vpop.f32.mrf.mxu0
    %v1800 = vadd.f32 0.0, %v1799
    %1801 = vmatmul.bf16.gmra.mxu0 %v1218
    %v1802 = vpop.f32.mrf.mxu0
    %v1803 = vadd.f32 0.0, %v1802
    %v1804 = vpop.f32.mrf.mxu0
    %v1805 = vadd.f32 0.0, %v1804
    %1806 = vmatmul.bf16.gmra.mxu0 %v1221
    %v1807 = vpop.f32.mrf.mxu0
    %v1808 = vadd.f32 0.0, %v1807
    %v1809 = vpop.f32.mrf.mxu0
    %v1810 = vadd.f32 0.0, %v1809
    %1811 = vmatmul.bf16.gmra.mxu0 %v1224
    %v1812 = vpop.f32.mrf.mxu0
    %v1813 = vadd.f32 0.0, %v1812
    %v1814 = vpop.f32.mrf.mxu0
    %v1815 = vadd.f32 0.0, %v1814
    %1816 = vmatmul.bf16.gmra.mxu0 %v1227
    %v1817 = vpop.f32.mrf.mxu0
    %v1818 = vadd.f32 0.0, %v1817
    %v1819 = vpop.f32.mrf.mxu0
    %v1820 = vadd.f32 0.0, %v1819
    %1821 = vmatmul.bf16.gmra.mxu0 %v1230
    %v1822 = vpop.f32.mrf.mxu0
    %v1823 = vadd.f32 0.0, %v1822
    %v1824 = vpop.f32.mrf.mxu0
    %v1825 = vadd.f32 0.0, %v1824
    %1826 = vmatmul.bf16.gmra.mxu0 %v1233
    %v1827 = vpop.f32.mrf.mxu0
    %v1828 = vadd.f32 0.0, %v1827
    %v1829 = vpop.f32.mrf.mxu0
    %v1830 = vadd.f32 0.0, %v1829
    %1831 = vmatmul.bf16.gmra.mxu0 %v1236
    %v1832 = vpop.f32.mrf.mxu0
    %v1833 = vadd.f32 0.0, %v1832
    %v1834 = vpop.f32.mrf.mxu0
    %v1835 = vadd.f32 0.0, %v1834
    %1836 = vmatmul.bf16.gmra.mxu0 %v1239
    %v1837 = vpop.f32.mrf.mxu0
    %v1838 = vadd.f32 0.0, %v1837
    %v1839 = vpop.f32.mrf.mxu0
    %v1840 = vadd.f32 0.0, %v1839
    %1841 = vmatmul.bf16.gmra.mxu0 %v1242
    %v1842 = vpop.f32.mrf.mxu0
    %v1843 = vadd.f32 0.0, %v1842
    %v1844 = vpop.f32.mrf.mxu0
    %v1845 = vadd.f32 0.0, %v1844
    %1846 = vmatmul.bf16.gmra.mxu0 %v1245
    %v1847 = vpop.f32.mrf.mxu0
    %v1848 = vadd.f32 0.0, %v1847
    %v1849 = vpop.f32.mrf.mxu0
    %v1850 = vadd.f32 0.0, %v1849
    %1851 = vmatmul.bf16.gmra.mxu0 %v1248
    %v1852 = vpop.f32.mrf.mxu0
    %v1853 = vadd.f32 0.0, %v1852
    %v1854 = vpop.f32.mrf.mxu0
    %v1855 = vadd.f32 0.0, %v1854
    %1856 = vmatmul.bf16.gmra.mxu0 %v1251
    %v1857 = vpop.f32.mrf.mxu0
    %v1858 = vadd.f32 0.0, %v1857
    %v1859 = vpop.f32.mrf.mxu0
    %v1860 = vadd.f32 0.0, %v1859
    %1861 = vmatmul.bf16.gmra.mxu0 %v1254
    %v1862 = vpop.f32.mrf.mxu0
    %v1863 = vadd.f32 0.0, %v1862
    %v1864 = vpop.f32.mrf.mxu0
    %v1865 = vadd.f32 0.0, %v1864
    %1866 = vmatmul.bf16.gmra.mxu0 %v1257
    %v1867 = vpop.f32.mrf.mxu0
    %v1868 = vadd.f32 0.0, %v1867
    %v1869 = vpop.f32.mrf.mxu0
    %v1870 = vadd.f32 0.0, %v1869
    %1871 = vmatmul.bf16.gmra.mxu0 %v1260
    %v1872 = vpop.f32.mrf.mxu0
    %v1873 = vadd.f32 0.0, %v1872
    %v1874 = vpop.f32.mrf.mxu0
    %v1875 = vadd.f32 0.0, %v1874
    %1876 = vmatmul.bf16.gmra.mxu0 %v1263
    %v1877 = vpop.f32.mrf.mxu0
    %v1878 = vadd.f32 0.0, %v1877
    %v1879 = vpop.f32.mrf.mxu0
    %v1880 = vadd.f32 0.0, %v1879
    %1881 = vmatmul.bf16.gmra.mxu0 %v1266
    %v1882 = vpop.f32.mrf.mxu0
    %v1883 = vadd.f32 0.0, %v1882
    %v1884 = vpop.f32.mrf.mxu0
    %v1885 = vadd.f32 0.0, %v1884
    %1886 = vmatmul.bf16.gmra.mxu0 %v1269
    %v1887 = vpop.f32.mrf.mxu0
    %v1888 = vadd.f32 0.0, %v1887
    %v1889 = vpop.f32.mrf.mxu0
    %v1890 = vadd.f32 0.0, %v1889
    %1891 = vmatmul.bf16.gmra.mxu0 %v1272
    %v1892 = vpop.f32.mrf.mxu0
    %v1893 = vadd.f32 0.0, %v1892
    %v1894 = vpop.f32.mrf.mxu0
    %v1895 = vadd.f32 0.0, %v1894
    %1896 = vmatmul.bf16.gmra.mxu0 %v1275
    %v1897 = vpop.f32.mrf.mxu0
    %v1898 = vadd.f32 0.0, %v1897
    %v1899 = vpop.f32.mrf.mxu0
    %v1900 = vadd.f32 0.0, %v1899
    %1901 = vmatmul.bf16.gmra.mxu0 %v1278
    %v1902 = vpop.f32.mrf.mxu0
    %v1903 = vadd.f32 0.0, %v1902
    %v1904 = vpop.f32.mrf.mxu0
    %v1905 = vadd.f32 0.0, %v1904
    %1906 = vmatmul.bf16.gmra.mxu0 %v1281
    %v1907 = vpop.f32.mrf.mxu0
    %v1908 = vadd.f32 0.0, %v1907
    %v1909 = vpop.f32.mrf.mxu0
    %v1910 = vadd.f32 0.0, %v1909
    %1911 = vmatmul.bf16.gmra.mxu0 %v1284
    %v1912 = vpop.f32.mrf.mxu0
    %v1913 = vadd.f32 0.0, %v1912
    %v1914 = vpop.f32.mrf.mxu0
    %v1915 = vadd.f32 0.0, %v1914
    %1916 = vmatmul.bf16.gmra.mxu0 %v1287
    %v1917 = vpop.f32.mrf.mxu0
    %v1918 = vadd.f32 0.0, %v1917
    %v1919 = vpop.f32.mrf.mxu0
    %v1920 = vadd.f32 0.0, %v1919
    %1921 = vmatmul.bf16.gmra.mxu0 %v1290
    %v1922 = vpop.f32.mrf.mxu0
    %v1923 = vadd.f32 0.0, %v1922
    %v1924 = vpop.f32.mrf.mxu0
    %v1925 = vadd.f32 0.0, %v1924
    %1926 = vmatmul.bf16.gmra.mxu0 %v1293
    %v1927 = vpop.f32.mrf.mxu0
    %v1928 = vadd.f32 0.0, %v1927
    %v1929 = vpop.f32.mrf.mxu0
    %v1930 = vadd.f32 0.0, %v1929
    %1931 = vmatmul.bf16.gmra.mxu0 %v1296
    %v1932 = vpop.f32.mrf.mxu0
    %v1933 = vadd.f32 0.0, %v1932
    %v1934 = vpop.f32.mrf.mxu0
    %v1935 = vadd.f32 0.0, %v1934
    %1936 = vmatmul.bf16.gmra.mxu0 %v1299
    %v1937 = vpop.f32.mrf.mxu0
    %v1938 = vadd.f32 0.0, %v1937
    %v1939 = vpop.f32.mrf.mxu0
    %v1940 = vadd.f32 0.0, %v1939
    %1941 = vmatmul.bf16.gmra.mxu0 %v1302
    %v1942 = vpop.f32.mrf.mxu0
    %v1943 = vadd.f32 0.0, %v1942
    %v1944 = vpop.f32.mrf.mxu0
    %v1945 = vadd.f32 0.0, %v1944
    %1946 = vmatmul.bf16.gmra.mxu0 %v1305
    %v1947 = vpop.f32.mrf.mxu0
    %v1948 = vadd.f32 0.0, %v1947
    %v1949 = vpop.f32.mrf.mxu0
    %v1950 = vadd.f32 0.0, %v1949
    %1951 = vmatmul.bf16.gmra.mxu0 %v1308
    %v1952 = vpop.f32.mrf.mxu0
    %v1953 = vadd.f32 0.0, %v1952
    %v1954 = vpop.f32.mrf.mxu0
    %v1955 = vadd.f32 0.0, %v1954
    %1956 = vmatmul.bf16.gmra.mxu0 %v1311
    %v1957 = vpop.f32.mrf.mxu0
    %v1958 = vadd.f32 0.0, %v1957
    %v1959 = vpop.f32.mrf.mxu0
    %v1960 = vadd.f32 0.0, %v1959
    %1961 = vdwg.mxu0
    %v1962 = vmax.f32 %v1323, 0.0
    %v1963 = vmax.f32 %v1325, 0.0
    %v1964 = vmax.f32 %v1328, 0.0
    %v1965 = vmax.f32 %v1330, 0.0
    %v1966 = vmax.f32 %v1333, 0.0
    %v1967 = vmax.f32 %v1335, 0.0
    %v1968 = vmax.f32 %v1338, 0.0
    %v1969 = vmax.f32 %v1340, 0.0
    %v1970 = vmax.f32 %v1343, 0.0
    %v1971 = vmax.f32 %v1345, 0.0
    %v1972 = vmax.f32 %v1348, 0.0
    %v1973 = vmax.f32 %v1350, 0.0
    %v1974 = vmax.f32 %v1353, 0.0
    %v1975 = vmax.f32 %v1355, 0.0
    %v1976 = vmax.f32 %v1358, 0.0
    %v1977 = vmax.f32 %v1360, 0.0
    %v1978 = vmax.f32 %v1363, 0.0
    %v1979 = vmax.f32 %v1365, 0.0
    %v1980 = vmax.f32 %v1368, 0.0
    %v1981 = vmax.f32 %v1370, 0.0
    %v1982 = vmax.f32 %v1373, 0.0
    %v1983 = vmax.f32 %v1375, 0.0
    %v1984 = vmax.f32 %v1378, 0.0
    %v1985 = vmax.f32 %v1380, 0.0
    %v1986 = vmax.f32 %v1383, 0.0
    %v1987 = vmax.f32 %v1385, 0.0
    %v1988 = vmax.f32 %v1388, 0.0
    %v1989 = vmax.f32 %v1390, 0.0
    %v1990 = vmax.f32 %v1393, 0.0
    %v1991 = vmax.f32 %v1395, 0.0
    %v1992 = vmax.f32 %v1398, 0.0
    %v1993 = vmax.f32 %v1400, 0.0
    %v1994 = vmax.f32 %v1403, 0.0
    %v1995 = vmax.f32 %v1405, 0.0
    %v1996 = vmax.f32 %v1408, 0.0
    %v1997 = vmax.f32 %v1410, 0.0
    %v1998 = vmax.f32 %v1413, 0.0
    %v1999 = vmax.f32 %v1415, 0.0
    %v2000 = vmax.f32 %v1418, 0.0
    %v2001 = vmax.f32 %v1420, 0.0
    %v2002 = vmax.f32 %v1423, 0.0
    %v2003 = vmax.f32 %v1425, 0.0
    %v2004 = vmax.f32 %v1428, 0.0
    %v2005 = vmax.f32 %v1430, 0.0
    %v2006 = vmax.f32 %v1433, 0.0
    %v2007 = vmax.f32 %v1435, 0.0
    %v2008 = vmax.f32 %v1438, 0.0
    %v2009 = vmax.f32 %v1440, 0.0
    %v2010 = vmax.f32 %v1443, 0.0
    %v2011 = vmax.f32 %v1445, 0.0
    %v2012 = vmax.f32 %v1448, 0.0
    %v2013 = vmax.f32 %v1450, 0.0
    %v2014 = vmax.f32 %v1453, 0.0
    %v2015 = vmax.f32 %v1455, 0.0
    %v2016 = vmax.f32 %v1458, 0.0
    %v2017 = vmax.f32 %v1460, 0.0
    %v2018 = vmax.f32 %v1463, 0.0
    %v2019 = vmax.f32 %v1465, 0.0
    %v2020 = vmax.f32 %v1468, 0.0
    %v2021 = vmax.f32 %v1470, 0.0
    %v2022 = vmax.f32 %v1473, 0.0
    %v2023 = vmax.f32 %v1475, 0.0
    %v2024 = vmax.f32 %v1478, 0.0
    %v2025 = vmax.f32 %v1480, 0.0
    %v2026 = vmax.f32 %v1483, 0.0
    %v2027 = vmax.f32 %v1485, 0.0
    %v2028 = vmax.f32 %v1488, 0.0
    %v2029 = vmax.f32 %v1490, 0.0
    %v2030 = vmax.f32 %v1493, 0.0
    %v2031 = vmax.f32 %v1495, 0.0
    %v2032 = vmax.f32 %v1498, 0.0
    %v2033 = vmax.f32 %v1500, 0.0
    %v2034 = vmax.f32 %v1503, 0.0
    %v2035 = vmax.f32 %v1505, 0.0
    %v2036 = vmax.f32 %v1508, 0.0
    %v2037 = vmax.f32 %v1510, 0.0
    %v2038 = vmax.f32 %v1513, 0.0
    %v2039 = vmax.f32 %v1515, 0.0
    %v2040 = vmax.f32 %v1518, 0.0
    %v2041 = vmax.f32 %v1520, 0.0
    %v2042 = vmax.f32 %v1523, 0.0
    %v2043 = vmax.f32 %v1525, 0.0
    %v2044 = vmax.f32 %v1528, 0.0
    %v2045 = vmax.f32 %v1530, 0.0
    %v2046 = vmax.f32 %v1533, 0.0
    %v2047 = vmax.f32 %v1535, 0.0
    %v2048 = vmax.f32 %v1538, 0.0
    %v2049 = vmax.f32 %v1540, 0.0
    %v2050 = vmax.f32 %v1543, 0.0
    %v2051 = vmax.f32 %v1545, 0.0
    %v2052 = vmax.f32 %v1548, 0.0
    %v2053 = vmax.f32 %v1550, 0.0
    %v2054 = vmax.f32 %v1553, 0.0
    %v2055 = vmax.f32 %v1555, 0.0
    %v2056 = vmax.f32 %v1558, 0.0
    %v2057 = vmax.f32 %v1560, 0.0
    %v2058 = vmax.f32 %v1563, 0.0
    %v2059 = vmax.f32 %v1565, 0.0
    %v2060 = vmax.f32 %v1568, 0.0
    %v2061 = vmax.f32 %v1570, 0.0
    %v2062 = vmax.f32 %v1573, 0.0
    %v2063 = vmax.f32 %v1575, 0.0
    %v2064 = vmax.f32 %v1578, 0.0
    %v2065 = vmax.f32 %v1580, 0.0
    %v2066 = vmax.f32 %v1583, 0.0
    %v2067 = vmax.f32 %v1585, 0.0
    %v2068 = vmax.f32 %v1588, 0.0
    %v2069 = vmax.f32 %v1590, 0.0
    %v2070 = vmax.f32 %v1593, 0.0
    %v2071 = vmax.f32 %v1595, 0.0
    %v2072 = vmax.f32 %v1598, 0.0
    %v2073 = vmax.f32 %v1600, 0.0
    %v2074 = vmax.f32 %v1603, 0.0
    %v2075 = vmax.f32 %v1605, 0.0
    %v2076 = vmax.f32 %v1608, 0.0
    %v2077 = vmax.f32 %v1610, 0.0
    %v2078 = vmax.f32 %v1613, 0.0
    %v2079 = vmax.f32 %v1615, 0.0
    %v2080 = vmax.f32 %v1618, 0.0
    %v2081 = vmax.f32 %v1620, 0.0
    %v2082 = vmax.f32 %v1623, 0.0
    %v2083 = vmax.f32 %v1625, 0.0
    %v2084 = vmax.f32 %v1628, 0.0
    %v2085 = vmax.f32 %v1630, 0.0
    %v2086 = vmax.f32 %v1633, 0.0
    %v2087 = vmax.f32 %v1635, 0.0
    %v2088 = vmax.f32 %v1638, 0.0
    %v2089 = vmax.f32 %v1640, 0.0
    %v2090 = vmax.f32 %v1643, 0.0
    %v2091 = vmax.f32 %v1645, 0.0
    %v2092 = vmax.f32 %v1648, 0.0
    %v2093 = vmax.f32 %v1650, 0.0
    %v2094 = vmax.f32 %v1653, 0.0
    %v2095 = vmax.f32 %v1655, 0.0
    %v2096 = vmax.f32 %v1658, 0.0
    %v2097 = vmax.f32 %v1660, 0.0
    %v2098 = vmax.f32 %v1663, 0.0
    %v2099 = vmax.f32 %v1665, 0.0
    %v2100 = vmax.f32 %v1668, 0.0
    %v2101 = vmax.f32 %v1670, 0.0
    %v2102 = vmax.f32 %v1673, 0.0
    %v2103 = vmax.f32 %v1675, 0.0
    %v2104 = vmax.f32 %v1678, 0.0
    %v2105 = vmax.f32 %v1680, 0.0
    %v2106 = vmax.f32 %v1683, 0.0
    %v2107 = vmax.f32 %v1685, 0.0
    %v2108 = vmax.f32 %v1688, 0.0
    %v2109 = vmax.f32 %v1690, 0.0
    %v2110 = vmax.f32 %v1693, 0.0
    %v2111 = vmax.f32 %v1695, 0.0
    %v2112 = vmax.f32 %v1698, 0.0
    %v2113 = vmax.f32 %v1700, 0.0
    %v2114 = vmax.f32 %v1703, 0.0
    %v2115 = vmax.f32 %v1705, 0.0
    %v2116 = vmax.f32 %v1708, 0.0
    %v2117 = vmax.f32 %v1710, 0.0
    %v2118 = vmax.f32 %v1713, 0.0
    %v2119 = vmax.f32 %v1715, 0.0
    %v2120 = vmax.f32 %v1718, 0.0
    %v2121 = vmax.f32 %v1720, 0.0
    %v2122 = vmax.f32 %v1723, 0.0
    %v2123 = vmax.f32 %v1725, 0.0
    %v2124 = vmax.f32 %v1728, 0.0
    %v2125 = vmax.f32 %v1730, 0.0
    %v2126 = vmax.f32 %v1733, 0.0
    %v2127 = vmax.f32 %v1735, 0.0
    %v2128 = vmax.f32 %v1738, 0.0
    %v2129 = vmax.f32 %v1740, 0.0
    %v2130 = vmax.f32 %v1743, 0.0
    %v2131 = vmax.f32 %v1745, 0.0
    %v2132 = vmax.f32 %v1748, 0.0
    %v2133 = vmax.f32 %v1750, 0.0
    %v2134 = vmax.f32 %v1753, 0.0
    %v2135 = vmax.f32 %v1755, 0.0
    %v2136 = vmax.f32 %v1758, 0.0
    %v2137 = vmax.f32 %v1760, 0.0
    %v2138 = vmax.f32 %v1763, 0.0
    %v2139 = vmax.f32 %v1765, 0.0
    %v2140 = vmax.f32 %v1768, 0.0
    %v2141 = vmax.f32 %v1770, 0.0
    %v2142 = vmax.f32 %v1773, 0.0
    %v2143 = vmax.f32 %v1775, 0.0
    %v2144 = vmax.f32 %v1778, 0.0
    %v2145 = vmax.f32 %v1780, 0.0
    %v2146 = vmax.f32 %v1783, 0.0
    %v2147 = vmax.f32 %v1785, 0.0
    %v2148 = vmax.f32 %v1788, 0.0
    %v2149 = vmax.f32 %v1790, 0.0
    %v2150 = vmax.f32 %v1793, 0.0
    %v2151 = vmax.f32 %v1795, 0.0
    %v2152 = vmax.f32 %v1798, 0.0
    %v2153 = vmax.f32 %v1800, 0.0
    %v2154 = vmax.f32 %v1803, 0.0
    %v2155 = vmax.f32 %v1805, 0.0
    %v2156 = vmax.f32 %v1808, 0.0
    %v2157 = vmax.f32 %v1810, 0.0
    %v2158 = vmax.f32 %v1813, 0.0
    %v2159 = vmax.f32 %v1815, 0.0
    %v2160 = vmax.f32 %v1818, 0.0
    %v2161 = vmax.f32 %v1820, 0.0
    %v2162 = vmax.f32 %v1823, 0.0
    %v2163 = vmax.f32 %v1825, 0.0
    %v2164 = vmax.f32 %v1828, 0.0
    %v2165 = vmax.f32 %v1830, 0.0
    %v2166 = vmax.f32 %v1833, 0.0
    %v2167 = vmax.f32 %v1835, 0.0
    %v2168 = vmax.f32 %v1838, 0.0
    %v2169 = vmax.f32 %v1840, 0.0
    %v2170 = vmax.f32 %v1843, 0.0
    %v2171 = vmax.f32 %v1845, 0.0
    %v2172 = vmax.f32 %v1848, 0.0
    %v2173 = vmax.f32 %v1850, 0.0
    %v2174 = vmax.f32 %v1853, 0.0
    %v2175 = vmax.f32 %v1855, 0.0
    %v2176 = vmax.f32 %v1858, 0.0
    %v2177 = vmax.f32 %v1860, 0.0
    %v2178 = vmax.f32 %v1863, 0.0
    %v2179 = vmax.f32 %v1865, 0.0
    %v2180 = vmax.f32 %v1868, 0.0
    %v2181 = vmax.f32 %v1870, 0.0
    %v2182 = vmax.f32 %v1873, 0.0
    %v2183 = vmax.f32 %v1875, 0.0
    %v2184 = vmax.f32 %v1878, 0.0
    %v2185 = vmax.f32 %v1880, 0.0
    %v2186 = vmax.f32 %v1883, 0.0
    %v2187 = vmax.f32 %v1885, 0.0
    %v2188 = vmax.f32 %v1888, 0.0
    %v2189 = vmax.f32 %v1890, 0.0
    %v2190 = vmax.f32 %v1893, 0.0
    %v2191 = vmax.f32 %v1895, 0.0
    %v2192 = vmax.f32 %v1898, 0.0
    %v2193 = vmax.f32 %v1900, 0.0
    %v2194 = vmax.f32 %v1903, 0.0
    %v2195 = vmax.f32 %v1905, 0.0
    %v2196 = vmax.f32 %v1908, 0.0
    %v2197 = vmax.f32 %v1910, 0.0
    %v2198 = vmax.f32 %v1913, 0.0
    %v2199 = vmax.f32 %v1915, 0.0
    %v2200 = vmax.f32 %v1918, 0.0
    %v2201 = vmax.f32 %v1920, 0.0
    %v2202 = vmax.f32 %v1923, 0.0
    %v2203 = vmax.f32 %v1925, 0.0
    %v2204 = vmax.f32 %v1928, 0.0
    %v2205 = vmax.f32 %v1930, 0.0
    %v2206 = vmax.f32 %v1933, 0.0
    %v2207 = vmax.f32 %v1935, 0.0
    %v2208 = vmax.f32 %v1938, 0.0
    %v2209 = vmax.f32 %v1940, 0.0
    %v2210 = vmax.f32 %v1943, 0.0
    %v2211 = vmax.f32 %v1945, 0.0
    %v2212 = vmax.f32 %v1948, 0.0
    %v2213 = vmax.f32 %v1950, 0.0
    %v2214 = vmax.f32 %v1953, 0.0
    %v2215 = vmax.f32 %v1955, 0.0
    %v2216 = vmax.f32 %v1958, 0.0
    %v2217 = vmax.f32 %v1960, 0.0
    %vm2218 = vcmask 523264
    %v2219 = vsel %vm2218, %v1962, -inf
    %v2220 = vsel %vm2218, %v1963, -inf
    %v2221 = vmax.f32 %v2219, %v2220
    %v2222 = vsel %vm2218, %v1964, -inf
    %v2223 = vmax.f32 %v2221, %v2222
    %v2224 = vsel %vm2218, %v1965, -inf
    %v2225 = vmax.f32 %v2223, %v2224
    %v2226 = vsel %vm2218, %v1966, -inf
    %v2227 = vmax.f32 %v2225, %v2226
    %v2228 = vsel %vm2218, %v1967, -inf
    %v2229 = vmax.f32 %v2227, %v2228
    %v2230 = vsel %vm2218, %v1968, -inf
    %v2231 = vmax.f32 %v2229, %v2230
    %v2232 = vsel %vm2218, %v1969, -inf
    %v2233 = vmax.f32 %v2231, %v2232
    %v2234 = vsel %vm2218, %v1970, -inf
    %v2235 = vmax.f32 %v2233, %v2234
    %v2236 = vsel %vm2218, %v1971, -inf
    %v2237 = vmax.f32 %v2235, %v2236
    %v2238 = vsel %vm2218, %v1972, -inf
    %v2239 = vmax.f32 %v2237, %v2238
    %v2240 = vsel %vm2218, %v1973, -inf
    %v2241 = vmax.f32 %v2239, %v2240
    %v2242 = vsel %vm2218, %v1974, -inf
    %v2243 = vmax.f32 %v2241, %v2242
    %v2244 = vsel %vm2218, %v1975, -inf
    %v2245 = vmax.f32 %v2243, %v2244
    %v2246 = vsel %vm2218, %v1976, -inf
    %v2247 = vmax.f32 %v2245, %v2246
    %v2248 = vsel %vm2218, %v1977, -inf
    %v2249 = vmax.f32 %v2247, %v2248
    %v2250 = vsel %vm2218, %v1978, -inf
    %v2251 = vmax.f32 %v2249, %v2250
    %v2252 = vsel %vm2218, %v1979, -inf
    %v2253 = vmax.f32 %v2251, %v2252
    %v2254 = vsel %vm2218, %v1980, -inf
    %v2255 = vmax.f32 %v2253, %v2254
    %v2256 = vsel %vm2218, %v1981, -inf
    %v2257 = vmax.f32 %v2255, %v2256
    %v2258 = vsel %vm2218, %v1982, -inf
    %v2259 = vmax.f32 %v2257, %v2258
    %v2260 = vsel %vm2218, %v1983, -inf
    %v2261 = vmax.f32 %v2259, %v2260
    %v2262 = vsel %vm2218, %v1984, -inf
    %v2263 = vmax.f32 %v2261, %v2262
    %v2264 = vsel %vm2218, %v1985, -inf
    %v2265 = vmax.f32 %v2263, %v2264
    %v2266 = vsel %vm2218, %v1986, -inf
    %v2267 = vmax.f32 %v2265, %v2266
    %v2268 = vsel %vm2218, %v1987, -inf
    %v2269 = vmax.f32 %v2267, %v2268
    %v2270 = vsel %vm2218, %v1988, -inf
    %v2271 = vmax.f32 %v2269, %v2270
    %v2272 = vsel %vm2218, %v1989, -inf
    %v2273 = vmax.f32 %v2271, %v2272
    %v2274 = vsel %vm2218, %v1990, -inf
    %v2275 = vmax.f32 %v2273, %v2274
    %v2276 = vsel %vm2218, %v1991, -inf
    %v2277 = vmax.f32 %v2275, %v2276
    %v2278 = vsel %vm2218, %v1992, -inf
    %v2279 = vmax.f32 %v2277, %v2278
    %v2280 = vsel %vm2218, %v1993, -inf
    %v2281 = vmax.f32 %v2279, %v2280
    %v2282 = vrot.slane %v2281, 4
    %v2283 = vmax.f32 %v2281, %v2282
    %v2284 = vrot.slane %v2283, 2
    %v2285 = vmax.f32 %v2283, %v2284
    %v2286 = vrot.slane %v2285, 1
    %v2287 = vmax.f32 %v2285, %v2286
    %v2288 = vsel %vm2218, %v1994, -inf
    %v2289 = vsel %vm2218, %v1995, -inf
    %v2290 = vmax.f32 %v2288, %v2289
    %v2291 = vsel %vm2218, %v1996, -inf
    %v2292 = vmax.f32 %v2290, %v2291
    %v2293 = vsel %vm2218, %v1997, -inf
    %v2294 = vmax.f32 %v2292, %v2293
    %v2295 = vsel %vm2218, %v1998, -inf
    %v2296 = vmax.f32 %v2294, %v2295
    %v2297 = vsel %vm2218, %v1999, -inf
    %v2298 = vmax.f32 %v2296, %v2297
    %v2299 = vsel %vm2218, %v2000, -inf
    %v2300 = vmax.f32 %v2298, %v2299
    %v2301 = vsel %vm2218, %v2001, -inf
    %v2302 = vmax.f32 %v2300, %v2301
    %v2303 = vsel %vm2218, %v2002, -inf
    %v2304 = vmax.f32 %v2302, %v2303
    %v2305 = vsel %vm2218, %v2003, -inf
    %v2306 = vmax.f32 %v2304, %v2305
    %v2307 = vsel %vm2218, %v2004, -inf
    %v2308 = vmax.f32 %v2306, %v2307
    %v2309 = vsel %vm2218, %v2005, -inf
    %v2310 = vmax.f32 %v2308, %v2309
    %v2311 = vsel %vm2218, %v2006, -inf
    %v2312 = vmax.f32 %v2310, %v2311
    %v2313 = vsel %vm2218, %v2007, -inf
    %v2314 = vmax.f32 %v2312, %v2313
    %v2315 = vsel %vm2218, %v2008, -inf
    %v2316 = vmax.f32 %v2314, %v2315
    %v2317 = vsel %vm2218, %v2009, -inf
    %v2318 = vmax.f32 %v2316, %v2317
    %v2319 = vsel %vm2218, %v2010, -inf
    %v2320 = vmax.f32 %v2318, %v2319
    %v2321 = vsel %vm2218, %v2011, -inf
    %v2322 = vmax.f32 %v2320, %v2321
    %v2323 = vsel %vm2218, %v2012, -inf
    %v2324 = vmax.f32 %v2322, %v2323
    %v2325 = vsel %vm2218, %v2013, -inf
    %v2326 = vmax.f32 %v2324, %v2325
    %v2327 = vsel %vm2218, %v2014, -inf
    %v2328 = vmax.f32 %v2326, %v2327
    %v2329 = vsel %vm2218, %v2015, -inf
    %v2330 = vmax.f32 %v2328, %v2329
    %v2331 = vsel %vm2218, %v2016, -inf
    %v2332 = vmax.f32 %v2330, %v2331
    %v2333 = vsel %vm2218, %v2017, -inf
    %v2334 = vmax.f32 %v2332, %v2333
    %v2335 = vsel %vm2218, %v2018, -inf
    %v2336 = vmax.f32 %v2334, %v2335
    %v2337 = vsel %vm2218, %v2019, -inf
    %v2338 = vmax.f32 %v2336, %v2337
    %v2339 = vsel %vm2218, %v2020, -inf
    %v2340 = vmax.f32 %v2338, %v2339
    %v2341 = vsel %vm2218, %v2021, -inf
    %v2342 = vmax.f32 %v2340, %v2341
    %v2343 = vsel %vm2218, %v2022, -inf
    %v2344 = vmax.f32 %v2342, %v2343
    %v2345 = vsel %vm2218, %v2023, -inf
    %v2346 = vmax.f32 %v2344, %v2345
    %v2347 = vsel %vm2218, %v2024, -inf
    %v2348 = vmax.f32 %v2346, %v2347
    %v2349 = vsel %vm2218, %v2025, -inf
    %v2350 = vmax.f32 %v2348, %v2349
    %v2351 = vrot.slane %v2350, 4
    %v2352 = vmax.f32 %v2350, %v2351
    %v2353 = vrot.slane %v2352, 2
    %v2354 = vmax.f32 %v2352, %v2353
    %v2355 = vrot.slane %v2354, 1
    %v2356 = vmax.f32 %v2354, %v2355
    %v2357 = vsel %vm2218, %v2026, -inf
    %v2358 = vsel %vm2218, %v2027, -inf
    %v2359 = vmax.f32 %v2357, %v2358
    %v2360 = vsel %vm2218, %v2028, -inf
    %v2361 = vmax.f32 %v2359, %v2360
    %v2362 = vsel %vm2218, %v2029, -inf
    %v2363 = vmax.f32 %v2361, %v2362
    %v2364 = vsel %vm2218, %v2030, -inf
    %v2365 = vmax.f32 %v2363, %v2364
    %v2366 = vsel %vm2218, %v2031, -inf
    %v2367 = vmax.f32 %v2365, %v2366
    %v2368 = vsel %vm2218, %v2032, -inf
    %v2369 = vmax.f32 %v2367, %v2368
    %v2370 = vsel %vm2218, %v2033, -inf
    %v2371 = vmax.f32 %v2369, %v2370
    %v2372 = vsel %vm2218, %v2034, -inf
    %v2373 = vmax.f32 %v2371, %v2372
    %v2374 = vsel %vm2218, %v2035, -inf
    %v2375 = vmax.f32 %v2373, %v2374
    %v2376 = vsel %vm2218, %v2036, -inf
    %v2377 = vmax.f32 %v2375, %v2376
    %v2378 = vsel %vm2218, %v2037, -inf
    %v2379 = vmax.f32 %v2377, %v2378
    %v2380 = vsel %vm2218, %v2038, -inf
    %v2381 = vmax.f32 %v2379, %v2380
    %v2382 = vsel %vm2218, %v2039, -inf
    %v2383 = vmax.f32 %v2381, %v2382
    %v2384 = vsel %vm2218, %v2040, -inf
    %v2385 = vmax.f32 %v2383, %v2384
    %v2386 = vsel %vm2218, %v2041, -inf
    %v2387 = vmax.f32 %v2385, %v2386
    %v2388 = vsel %vm2218, %v2042, -inf
    %v2389 = vmax.f32 %v2387, %v2388
    %v2390 = vsel %vm2218, %v2043, -inf
    %v2391 = vmax.f32 %v2389, %v2390
    %v2392 = vsel %vm2218, %v2044, -inf
    %v2393 = vmax.f32 %v2391, %v2392
    %v2394 = vsel %vm2218, %v2045, -inf
    %v2395 = vmax.f32 %v2393, %v2394
    %v2396 = vsel %vm2218, %v2046, -inf
    %v2397 = vmax.f32 %v2395, %v2396
    %v2398 = vsel %vm2218, %v2047, -inf
    %v2399 = vmax.f32 %v2397, %v2398
    %v2400 = vsel %vm2218, %v2048, -inf
    %v2401 = vmax.f32 %v2399, %v2400
    %v2402 = vsel %vm2218, %v2049, -inf
    %v2403 = vmax.f32 %v2401, %v2402
    %v2404 = vsel %vm2218, %v2050, -inf
    %v2405 = vmax.f32 %v2403, %v2404
    %v2406 = vsel %vm2218, %v2051, -inf
    %v2407 = vmax.f32 %v2405, %v2406
    %v2408 = vsel %vm2218, %v2052, -inf
    %v2409 = vmax.f32 %v2407, %v2408
    %v2410 = vsel %vm2218, %v2053, -inf
    %v2411 = vmax.f32 %v2409, %v2410
    %v2412 = vsel %vm2218, %v2054, -inf
    %v2413 = vmax.f32 %v2411, %v2412
    %v2414 = vsel %vm2218, %v2055, -inf
    %v2415 = vmax.f32 %v2413, %v2414
    %v2416 = vsel %vm2218, %v2056, -inf
    %v2417 = vmax.f32 %v2415, %v2416
    %v2418 = vsel %vm2218, %v2057, -inf
    %v2419 = vmax.f32 %v2417, %v2418
    %v2420 = vrot.slane %v2419, 4
    %v2421 = vmax.f32 %v2419, %v2420
    %v2422 = vrot.slane %v2421, 2
    %v2423 = vmax.f32 %v2421, %v2422
    %v2424 = vrot.slane %v2423, 1
    %v2425 = vmax.f32 %v2423, %v2424
    %v2426 = vsel %vm2218, %v2058, -inf
    %v2427 = vsel %vm2218, %v2059, -inf
    %v2428 = vmax.f32 %v2426, %v2427
    %v2429 = vsel %vm2218, %v2060, -inf
    %v2430 = vmax.f32 %v2428, %v2429
    %v2431 = vsel %vm2218, %v2061, -inf
    %v2432 = vmax.f32 %v2430, %v2431
    %v2433 = vsel %vm2218, %v2062, -inf
    %v2434 = vmax.f32 %v2432, %v2433
    %v2435 = vsel %vm2218, %v2063, -inf
    %v2436 = vmax.f32 %v2434, %v2435
    %v2437 = vsel %vm2218, %v2064, -inf
    %v2438 = vmax.f32 %v2436, %v2437
    %v2439 = vsel %vm2218, %v2065, -inf
    %v2440 = vmax.f32 %v2438, %v2439
    %v2441 = vsel %vm2218, %v2066, -inf
    %v2442 = vmax.f32 %v2440, %v2441
    %v2443 = vsel %vm2218, %v2067, -inf
    %v2444 = vmax.f32 %v2442, %v2443
    %v2445 = vsel %vm2218, %v2068, -inf
    %v2446 = vmax.f32 %v2444, %v2445
    %v2447 = vsel %vm2218, %v2069, -inf
    %v2448 = vmax.f32 %v2446, %v2447
    %v2449 = vsel %vm2218, %v2070, -inf
    %v2450 = vmax.f32 %v2448, %v2449
    %v2451 = vsel %vm2218, %v2071, -inf
    %v2452 = vmax.f32 %v2450, %v2451
    %v2453 = vsel %vm2218, %v2072, -inf
    %v2454 = vmax.f32 %v2452, %v2453
    %v2455 = vsel %vm2218, %v2073, -inf
    %v2456 = vmax.f32 %v2454, %v2455
    %v2457 = vsel %vm2218, %v2074, -inf
    %v2458 = vmax.f32 %v2456, %v2457
    %v2459 = vsel %vm2218, %v2075, -inf
    %v2460 = vmax.f32 %v2458, %v2459
    %v2461 = vsel %vm2218, %v2076, -inf
    %v2462 = vmax.f32 %v2460, %v2461
    %v2463 = vsel %vm2218, %v2077, -inf
    %v2464 = vmax.f32 %v2462, %v2463
    %v2465 = vsel %vm2218, %v2078, -inf
    %v2466 = vmax.f32 %v2464, %v2465
    %v2467 = vsel %vm2218, %v2079, -inf
    %v2468 = vmax.f32 %v2466, %v2467
    %v2469 = vsel %vm2218, %v2080, -inf
    %v2470 = vmax.f32 %v2468, %v2469
    %v2471 = vsel %vm2218, %v2081, -inf
    %v2472 = vmax.f32 %v2470, %v2471
    %v2473 = vsel %vm2218, %v2082, -inf
    %v2474 = vmax.f32 %v2472, %v2473
    %v2475 = vsel %vm2218, %v2083, -inf
    %v2476 = vmax.f32 %v2474, %v2475
    %v2477 = vsel %vm2218, %v2084, -inf
    %v2478 = vmax.f32 %v2476, %v2477
    %v2479 = vsel %vm2218, %v2085, -inf
    %v2480 = vmax.f32 %v2478, %v2479
    %v2481 = vsel %vm2218, %v2086, -inf
    %v2482 = vmax.f32 %v2480, %v2481
    %v2483 = vsel %vm2218, %v2087, -inf
    %v2484 = vmax.f32 %v2482, %v2483
    %v2485 = vsel %vm2218, %v2088, -inf
    %v2486 = vmax.f32 %v2484, %v2485
    %v2487 = vsel %vm2218, %v2089, -inf
    %v2488 = vmax.f32 %v2486, %v2487
    %v2489 = vrot.slane %v2488, 4
    %v2490 = vmax.f32 %v2488, %v2489
    %v2491 = vrot.slane %v2490, 2
    %v2492 = vmax.f32 %v2490, %v2491
    %v2493 = vrot.slane %v2492, 1
    %v2494 = vmax.f32 %v2492, %v2493
    %v2495 = vsel %vm2218, %v2090, -inf
    %v2496 = vsel %vm2218, %v2091, -inf
    %v2497 = vmax.f32 %v2495, %v2496
    %v2498 = vsel %vm2218, %v2092, -inf
    %v2499 = vmax.f32 %v2497, %v2498
    %v2500 = vsel %vm2218, %v2093, -inf
    %v2501 = vmax.f32 %v2499, %v2500
    %v2502 = vsel %vm2218, %v2094, -inf
    %v2503 = vmax.f32 %v2501, %v2502
    %v2504 = vsel %vm2218, %v2095, -inf
    %v2505 = vmax.f32 %v2503, %v2504
    %v2506 = vsel %vm2218, %v2096, -inf
    %v2507 = vmax.f32 %v2505, %v2506
    %v2508 = vsel %vm2218, %v2097, -inf
    %v2509 = vmax.f32 %v2507, %v2508
    %v2510 = vsel %vm2218, %v2098, -inf
    %v2511 = vmax.f32 %v2509, %v2510
    %v2512 = vsel %vm2218, %v2099, -inf
    %v2513 = vmax.f32 %v2511, %v2512
    %v2514 = vsel %vm2218, %v2100, -inf
    %v2515 = vmax.f32 %v2513, %v2514
    %v2516 = vsel %vm2218, %v2101, -inf
    %v2517 = vmax.f32 %v2515, %v2516
    %v2518 = vsel %vm2218, %v2102, -inf
    %v2519 = vmax.f32 %v2517, %v2518
    %v2520 = vsel %vm2218, %v2103, -inf
    %v2521 = vmax.f32 %v2519, %v2520
    %v2522 = vsel %vm2218, %v2104, -inf
    %v2523 = vmax.f32 %v2521, %v2522
    %v2524 = vsel %vm2218, %v2105, -inf
    %v2525 = vmax.f32 %v2523, %v2524
    %v2526 = vsel %vm2218, %v2106, -inf
    %v2527 = vmax.f32 %v2525, %v2526
    %v2528 = vsel %vm2218, %v2107, -inf
    %v2529 = vmax.f32 %v2527, %v2528
    %v2530 = vsel %vm2218, %v2108, -inf
    %v2531 = vmax.f32 %v2529, %v2530
    %v2532 = vsel %vm2218, %v2109, -inf
    %v2533 = vmax.f32 %v2531, %v2532
    %v2534 = vsel %vm2218, %v2110, -inf
    %v2535 = vmax.f32 %v2533, %v2534
    %v2536 = vsel %vm2218, %v2111, -inf
    %v2537 = vmax.f32 %v2535, %v2536
    %v2538 = vsel %vm2218, %v2112, -inf
    %v2539 = vmax.f32 %v2537, %v2538
    %v2540 = vsel %vm2218, %v2113, -inf
    %v2541 = vmax.f32 %v2539, %v2540
    %v2542 = vsel %vm2218, %v2114, -inf
    %v2543 = vmax.f32 %v2541, %v2542
    %v2544 = vsel %vm2218, %v2115, -inf
    %v2545 = vmax.f32 %v2543, %v2544
    %v2546 = vsel %vm2218, %v2116, -inf
    %v2547 = vmax.f32 %v2545, %v2546
    %v2548 = vsel %vm2218, %v2117, -inf
    %v2549 = vmax.f32 %v2547, %v2548
    %v2550 = vsel %vm2218, %v2118, -inf
    %v2551 = vmax.f32 %v2549, %v2550
    %v2552 = vsel %vm2218, %v2119, -inf
    %v2553 = vmax.f32 %v2551, %v2552
    %v2554 = vsel %vm2218, %v2120, -inf
    %v2555 = vmax.f32 %v2553, %v2554
    %v2556 = vsel %vm2218, %v2121, -inf
    %v2557 = vmax.f32 %v2555, %v2556
    %v2558 = vrot.slane %v2557, 4
    %v2559 = vmax.f32 %v2557, %v2558
    %v2560 = vrot.slane %v2559, 2
    %v2561 = vmax.f32 %v2559, %v2560
    %v2562 = vrot.slane %v2561, 1
    %v2563 = vmax.f32 %v2561, %v2562
    %v2564 = vsel %vm2218, %v2122, -inf
    %v2565 = vsel %vm2218, %v2123, -inf
    %v2566 = vmax.f32 %v2564, %v2565
    %v2567 = vsel %vm2218, %v2124, -inf
    %v2568 = vmax.f32 %v2566, %v2567
    %v2569 = vsel %vm2218, %v2125, -inf
    %v2570 = vmax.f32 %v2568, %v2569
    %v2571 = vsel %vm2218, %v2126, -inf
    %v2572 = vmax.f32 %v2570, %v2571
    %v2573 = vsel %vm2218, %v2127, -inf
    %v2574 = vmax.f32 %v2572, %v2573
    %v2575 = vsel %vm2218, %v2128, -inf
    %v2576 = vmax.f32 %v2574, %v2575
    %v2577 = vsel %vm2218, %v2129, -inf
    %v2578 = vmax.f32 %v2576, %v2577
    %v2579 = vsel %vm2218, %v2130, -inf
    %v2580 = vmax.f32 %v2578, %v2579
    %v2581 = vsel %vm2218, %v2131, -inf
    %v2582 = vmax.f32 %v2580, %v2581
    %v2583 = vsel %vm2218, %v2132, -inf
    %v2584 = vmax.f32 %v2582, %v2583
    %v2585 = vsel %vm2218, %v2133, -inf
    %v2586 = vmax.f32 %v2584, %v2585
    %v2587 = vsel %vm2218, %v2134, -inf
    %v2588 = vmax.f32 %v2586, %v2587
    %v2589 = vsel %vm2218, %v2135, -inf
    %v2590 = vmax.f32 %v2588, %v2589
    %v2591 = vsel %vm2218, %v2136, -inf
    %v2592 = vmax.f32 %v2590, %v2591
    %v2593 = vsel %vm2218, %v2137, -inf
    %v2594 = vmax.f32 %v2592, %v2593
    %v2595 = vsel %vm2218, %v2138, -inf
    %v2596 = vmax.f32 %v2594, %v2595
    %v2597 = vsel %vm2218, %v2139, -inf
    %v2598 = vmax.f32 %v2596, %v2597
    %v2599 = vsel %vm2218, %v2140, -inf
    %v2600 = vmax.f32 %v2598, %v2599
    %v2601 = vsel %vm2218, %v2141, -inf
    %v2602 = vmax.f32 %v2600, %v2601
    %v2603 = vsel %vm2218, %v2142, -inf
    %v2604 = vmax.f32 %v2602, %v2603
    %v2605 = vsel %vm2218, %v2143, -inf
    %v2606 = vmax.f32 %v2604, %v2605
    %v2607 = vsel %vm2218, %v2144, -inf
    %v2608 = vmax.f32 %v2606, %v2607
    %v2609 = vsel %vm2218, %v2145, -inf
    %v2610 = vmax.f32 %v2608, %v2609
    %v2611 = vsel %vm2218, %v2146, -inf
    %v2612 = vmax.f32 %v2610, %v2611
    %v2613 = vsel %vm2218, %v2147, -inf
    %v2614 = vmax.f32 %v2612, %v2613
    %v2615 = vsel %vm2218, %v2148, -inf
    %v2616 = vmax.f32 %v2614, %v2615
    %v2617 = vsel %vm2218, %v2149, -inf
    %v2618 = vmax.f32 %v2616, %v2617
    %v2619 = vsel %vm2218, %v2150, -inf
    %v2620 = vmax.f32 %v2618, %v2619
    %v2621 = vsel %vm2218, %v2151, -inf
    %v2622 = vmax.f32 %v2620, %v2621
    %v2623 = vsel %vm2218, %v2152, -inf
    %v2624 = vmax.f32 %v2622, %v2623
    %v2625 = vsel %vm2218, %v2153, -inf
    %v2626 = vmax.f32 %v2624, %v2625
    %v2627 = vrot.slane %v2626, 4
    %v2628 = vmax.f32 %v2626, %v2627
    %v2629 = vrot.slane %v2628, 2
    %v2630 = vmax.f32 %v2628, %v2629
    %v2631 = vrot.slane %v2630, 1
    %v2632 = vmax.f32 %v2630, %v2631
    %v2633 = vsel %vm2218, %v2154, -inf
    %v2634 = vsel %vm2218, %v2155, -inf
    %v2635 = vmax.f32 %v2633, %v2634
    %v2636 = vsel %vm2218, %v2156, -inf
    %v2637 = vmax.f32 %v2635, %v2636
    %v2638 = vsel %vm2218, %v2157, -inf
    %v2639 = vmax.f32 %v2637, %v2638
    %v2640 = vsel %vm2218, %v2158, -inf
    %v2641 = vmax.f32 %v2639, %v2640
    %v2642 = vsel %vm2218, %v2159, -inf
    %v2643 = vmax.f32 %v2641, %v2642
    %v2644 = vsel %vm2218, %v2160, -inf
    %v2645 = vmax.f32 %v2643, %v2644
    %v2646 = vsel %vm2218, %v2161, -inf
    %v2647 = vmax.f32 %v2645, %v2646
    %v2648 = vsel %vm2218, %v2162, -inf
    %v2649 = vmax.f32 %v2647, %v2648
    %v2650 = vsel %vm2218, %v2163, -inf
    %v2651 = vmax.f32 %v2649, %v2650
    %v2652 = vsel %vm2218, %v2164, -inf
    %v2653 = vmax.f32 %v2651, %v2652
    %v2654 = vsel %vm2218, %v2165, -inf
    %v2655 = vmax.f32 %v2653, %v2654
    %v2656 = vsel %vm2218, %v2166, -inf
    %v2657 = vmax.f32 %v2655, %v2656
    %v2658 = vsel %vm2218, %v2167, -inf
    %v2659 = vmax.f32 %v2657, %v2658
    %v2660 = vsel %vm2218, %v2168, -inf
    %v2661 = vmax.f32 %v2659, %v2660
    %v2662 = vsel %vm2218, %v2169, -inf
    %v2663 = vmax.f32 %v2661, %v2662
    %v2664 = vsel %vm2218, %v2170, -inf
    %v2665 = vmax.f32 %v2663, %v2664
    %v2666 = vsel %vm2218, %v2171, -inf
    %v2667 = vmax.f32 %v2665, %v2666
    %v2668 = vsel %vm2218, %v2172, -inf
    %v2669 = vmax.f32 %v2667, %v2668
    %v2670 = vsel %vm2218, %v2173, -inf
    %v2671 = vmax.f32 %v2669, %v2670
    %v2672 = vsel %vm2218, %v2174, -inf
    %v2673 = vmax.f32 %v2671, %v2672
    %v2674 = vsel %vm2218, %v2175, -inf
    %v2675 = vmax.f32 %v2673, %v2674
    %v2676 = vsel %vm2218, %v2176, -inf
    %v2677 = vmax.f32 %v2675, %v2676
    %v2678 = vsel %vm2218, %v2177, -inf
    %v2679 = vmax.f32 %v2677, %v2678
    %v2680 = vsel %vm2218, %v2178, -inf
    %v2681 = vmax.f32 %v2679, %v2680
    %v2682 = vsel %vm2218, %v2179, -inf
    %v2683 = vmax.f32 %v2681, %v2682
    %v2684 = vsel %vm2218, %v2180, -inf
    %v2685 = vmax.f32 %v2683, %v2684
    %v2686 = vsel %vm2218, %v2181, -inf
    %v2687 = vmax.f32 %v2685, %v2686
    %v2688 = vsel %vm2218, %v2182, -inf
    %v2689 = vmax.f32 %v2687, %v2688
    %v2690 = vsel %vm2218, %v2183, -inf
    %v2691 = vmax.f32 %v2689, %v2690
    %v2692 = vsel %vm2218, %v2184, -inf
    %v2693 = vmax.f32 %v2691, %v2692
    %v2694 = vsel %vm2218, %v2185, -inf
    %v2695 = vmax.f32 %v2693, %v2694
    %v2696 = vrot.slane %v2695, 4
    %v2697 = vmax.f32 %v2695, %v2696
    %v2698 = vrot.slane %v2697, 2
    %v2699 = vmax.f32 %v2697, %v2698
    %v2700 = vrot.slane %v2699, 1
    %v2701 = vmax.f32 %v2699, %v2700
    %v2702 = vsel %vm2218, %v2186, -inf
    %v2703 = vsel %vm2218, %v2187, -inf
    %v2704 = vmax.f32 %v2702, %v2703
    %v2705 = vsel %vm2218, %v2188, -inf
    %v2706 = vmax.f32 %v2704, %v2705
    %v2707 = vsel %vm2218, %v2189, -inf
    %v2708 = vmax.f32 %v2706, %v2707
    %v2709 = vsel %vm2218, %v2190, -inf
    %v2710 = vmax.f32 %v2708, %v2709
    %v2711 = vsel %vm2218, %v2191, -inf
    %v2712 = vmax.f32 %v2710, %v2711
    %v2713 = vsel %vm2218, %v2192, -inf
    %v2714 = vmax.f32 %v2712, %v2713
    %v2715 = vsel %vm2218, %v2193, -inf
    %v2716 = vmax.f32 %v2714, %v2715
    %v2717 = vsel %vm2218, %v2194, -inf
    %v2718 = vmax.f32 %v2716, %v2717
    %v2719 = vsel %vm2218, %v2195, -inf
    %v2720 = vmax.f32 %v2718, %v2719
    %v2721 = vsel %vm2218, %v2196, -inf
    %v2722 = vmax.f32 %v2720, %v2721
    %v2723 = vsel %vm2218, %v2197, -inf
    %v2724 = vmax.f32 %v2722, %v2723
    %v2725 = vsel %vm2218, %v2198, -inf
    %v2726 = vmax.f32 %v2724, %v2725
    %v2727 = vsel %vm2218, %v2199, -inf
    %v2728 = vmax.f32 %v2726, %v2727
    %v2729 = vsel %vm2218, %v2200, -inf
    %v2730 = vmax.f32 %v2728, %v2729
    %v2731 = vsel %vm2218, %v2201, -inf
    %v2732 = vmax.f32 %v2730, %v2731
    %v2733 = vsel %vm2218, %v2202, -inf
    %v2734 = vmax.f32 %v2732, %v2733
    %v2735 = vsel %vm2218, %v2203, -inf
    %v2736 = vmax.f32 %v2734, %v2735
    %v2737 = vsel %vm2218, %v2204, -inf
    %v2738 = vmax.f32 %v2736, %v2737
    %v2739 = vsel %vm2218, %v2205, -inf
    %v2740 = vmax.f32 %v2738, %v2739
    %v2741 = vsel %vm2218, %v2206, -inf
    %v2742 = vmax.f32 %v2740, %v2741
    %v2743 = vsel %vm2218, %v2207, -inf
    %v2744 = vmax.f32 %v2742, %v2743
    %v2745 = vsel %vm2218, %v2208, -inf
    %v2746 = vmax.f32 %v2744, %v2745
    %v2747 = vsel %vm2218, %v2209, -inf
    %v2748 = vmax.f32 %v2746, %v2747
    %v2749 = vsel %vm2218, %v2210, -inf
    %v2750 = vmax.f32 %v2748, %v2749
    %v2751 = vsel %vm2218, %v2211, -inf
    %v2752 = vmax.f32 %v2750, %v2751
    %v2753 = vsel %vm2218, %v2212, -inf
    %v2754 = vmax.f32 %v2752, %v2753
    %v2755 = vsel %vm2218, %v2213, -inf
    %v2756 = vmax.f32 %v2754, %v2755
    %v2757 = vsel %vm2218, %v2214, -inf
    %v2758 = vmax.f32 %v2756, %v2757
    %v2759 = vsel %vm2218, %v2215, -inf
    %v2760 = vmax.f32 %v2758, %v2759
    %v2761 = vsel %vm2218, %v2216, -inf
    %v2762 = vmax.f32 %v2760, %v2761
    %v2763 = vsel %vm2218, %v2217, -inf
    %v2764 = vmax.f32 %v2762, %v2763
    %v2765 = vrot.slane %v2764, 4
    %v2766 = vmax.f32 %v2764, %v2765
    %v2767 = vrot.slane %v2766, 2
    %v2768 = vmax.f32 %v2766, %v2767
    %v2769 = vrot.slane %v2768, 1
    %v2770 = vmax.f32 %v2768, %v2769
    %s2771 = smul.u32 0, 8
    %vm2780 = vcmask 1041409
    %v2781 = vsel %vm2780, %v2356, %v2287
    %vm2782 = vcmask 1042434
    %v2783 = vsel %vm2782, %v2425, %v2781
    %vm2784 = vcmask 1043459
    %v2785 = vsel %vm2784, %v2494, %v2783
    %vm2786 = vcmask 1044484
    %v2787 = vsel %vm2786, %v2563, %v2785
    %vm2788 = vcmask 1045509
    %v2789 = vsel %vm2788, %v2632, %v2787
    %vm2790 = vcmask 1046534
    %v2791 = vsel %vm2790, %v2701, %v2789
    %vm2792 = vcmask 1047559
    %v2793 = vsel %vm2792, %v2770, %v2791
    %s2795 = scalar_lea.vmem [#allocation2], %s2771
    %2796 = vst.msk [vmem:[%s2795] sm:$0xff] %vm2218, %v2793
    %p2797 = scmp.eq.s32.totalorder 0, 0
    // Predicated region
    $region14: #{simple_trans_forward.1} parent=1 // pred_check
      %p2798 = pneg %p2797
    $region15: #{simple_trans_forward.1} parent=1 // pred_check_branch
      %2800 = sbr.rel (%p2798) target = $region17
    $region16: #{simple_trans_forward.1} parent=1 // pred_region
      %v2801 = vld [vmem:[#allocation2] sm:$0xff]
      %v2802 = vld [vmem:[%s2] sm:$0x1]
      %v2803 = vld [vmem:[%s2 + $0x1] sm:$0x1]
      %v2804 = vld [vmem:[%s2 + $0x2] sm:$0x1]
      %v2805 = vld [vmem:[%s2 + $0x3] sm:$0x1]
      %v2806 = vld [vmem:[%s2 + $0x4] sm:$0x1]
      %v2807 = vld [vmem:[%s2 + $0x5] sm:$0x1]
      %v2808 = vld [vmem:[%s2 + $0x6] sm:$0x1]
      %v2809 = vsel %vm2218, %v2801, 0.0
      %2810 = vadd.xlane.f32.xlu0 %v2809
      %v2811 = vpop.xlane.xlu0 %2810
      %v2812 = vrcp.pop 64.0
      %v2813 = vmul.f32 64.0, %v2812
      %v2814 = vsub.f32 1.0, %v2813
      %v2815 = vmul.f32 %v2812, %v2814
      %v2816 = vadd.f32 %v2812, %v2815
      %vm2817 = vweird.f32 %v2812
      %v2818 = vsel %vm2817, %v2812, %v2816
      %v2819 = vmul.f32 %v2811, %v2818
      %v2820 = vsub.f32 %v2801, %v2819
      %v2821 = vmul.f32 %v2820, %v2820
      %v2822 = vsel %vm2218, %v2821, 0.0
      %2823 = vadd.xlane.f32.xlu0 %v2822
      %v2824 = vpop.xlane.xlu0 %2823
      %v2825 = vmul.f32 %v2824, %v2818
      %v2826 = vadd.f32 %v2825, 1e-05
      %v2827 = vrsqrt.pop %v2826
      %v2828 = vmul.f32 %v2827, %v2826
      %v2829 = vmul.f32 %v2828, %v2827
      %v2830 = vmul.f32 0.5, %v2829
      %v2831 = vsub.f32 1.5, %v2830
      %v2832 = vmul.f32 %v2827, %v2831
      %vm2833 = vweird.f32 %v2826
      %vm2834 = vweird.f32 %v2827
      %vm2835 = vmor %vm2833, %vm2834
      %v2836 = vsel %vm2835, %v2827, %v2832
      %v2837 = vmul.f32 %v2820, %v2836
      %v2838 = vperm.slane %v2802, 0
      %v2839 = vmul.f32 %v2837, %v2838
      %v2840 = vperm.slane %v2803, 0
      %v2841 = vadd.f32 %v2839, %v2840
      %v2842 = vperm.slane %v2804, 0
      %v2843 = vmul.f32 %v2841, %v2842
      %v2844 = vsel %vm2218, %v2843, 0.0
      %2845 = vadd.xlane.f32.xlu0 %v2844
      %v2846 = vpop.xlane.xlu0 %2845
      %v2847 = vperm.slane %v2808, 0
      %v2848 = vadd.f32 %v2846, %v2847
      %vm2849 = vcmask 7168
      %v2851 = vsel %vm2849, %v2848, 0
      %2853 = vmatpush.xpose.msra.mxu0 0.0
      %2854 = vmatpush.xpose.msra.mxu0 0.0
      %2855 = vmatpush.xpose.msra.mxu0 0.0
      %2856 = vmatpush.xpose.msra.mxu0 0.0
      %2857 = vmatpush.xpose.msra.mxu0 0.0
      %2858 = vmatpush.xpose.msra.mxu0 0.0
      %2859 = vmatpush.xpose.msra.mxu0 0.0
      %2860 = vmatpush.xpose.msra.mxu0 0.0
      %2861 = vmatpush.xpose.msra.mxu0 0.0
      %2862 = vmatpush.xpose.msra.mxu0 0.0
      %2863 = vmatpush.xpose.msra.mxu0 0.0
      %2864 = vmatpush.xpose.msra.mxu0 0.0
      %2865 = vmatpush.xpose.msra.mxu0 0.0
      %2866 = vmatpush.xpose.msra.mxu0 0.0
      %2867 = vmatpush.xpose.msra.mxu0 0.0
      %2868 = vmatpush.xpose.msra.mxu0 %v2851
      %2869 = vmatmul.f32.gmra.mxu0 %v2851
      %v2870 = vpop.f32.mrf.mxu0
      %v2871 = vadd.f32 0.0, %v2870
      %2872 = vdwg.mxu0
      %v2873 = vmul.f32 %v2871, 0.5
      %vm2874 = vcmask 64512
      %v2875 = vsel %vm2874, %v2873, -inf
      %2876 = vmax.xlane.f32.xlu0 %v2875
      %v2877 = vpop.xlane.xlu0 %2876
      %v2878 = vsub.f32 %v2873, %v2877
      %v2879 = vmul.f32 %v2878, 1.442695
      %v2880 = vpow.pop %v2879
      %v2881 = vsel %vm2874, %v2880, 0.0
      %2882 = vadd.xlane.f32.xlu0 %v2881
      %v2883 = vpop.xlane.xlu0 %2882
      %v2884 = vrcp.pop %v2883
      %v2885 = vmul.f32 %v2883, %v2884
      %v2886 = vsub.f32 1.0, %v2885
      %v2887 = vmul.f32 %v2884, %v2886
      %v2888 = vadd.f32 %v2884, %v2887
      %vm2889 = vweird.f32 %v2883
      %vm2890 = vweird.f32 %v2884
      %vm2891 = vmor %vm2889, %vm2890
      %v2892 = vsel %vm2891, %v2884, %v2888
      %v2893 = vand.u32 2147483647, %v2883
      %vm2894 = vcmp.eq.f32.partialorder %v2893, 8.507059e+37
      %v2895 = vand.u32 %v2883, 2147483648
      %v2896 = vor.u32 1.1754944e-38, %v2895
      %v2897 = vsel %vm2894, %v2896, %v2892
      %v2898 = vmul.f32 %v2880, %v2897
      %v2900 = vsel %vm2874, %v2898, 0
      %2902 = vmatpush.msra.mxu0 0.0
      %2903 = vmatpush.msra.mxu0 0.0
      %2904 = vmatpush.msra.mxu0 0.0
      %2905 = vmatpush.msra.mxu0 0.0
      %2906 = vmatpush.msra.mxu0 0.0
      %2907 = vmatpush.msra.mxu0 0.0
      %2908 = vmatpush.msra.mxu0 0.0
      %2909 = vmatpush.msra.mxu0 0.0
      %2910 = vmatpush.msra.mxu0 0.0
      %2911 = vmatpush.msra.mxu0 0.0
      %2912 = vmatpush.msra.mxu0 0.0
      %2913 = vmatpush.msra.mxu0 0.0
      %2914 = vmatpush.msra.mxu0 0.0
      %2915 = vmatpush.msra.mxu0 0.0
      %2916 = vmatpush.msra.mxu0 0.0
      %2917 = vmatpush.msra.mxu0 %v2801
      %2918 = vmatmul.f32.gmra.mxu0 %v2900
      %v2919 = vpop.f32.mrf.mxu0
      %v2920 = vadd.f32 0.0, %v2919
      %2921 = vdwg.mxu0
      %v2922 = vadd.f32 %v2801, %v2920
      %v2923 = vsel %vm2218, %v2922, -inf
      %v2924 = vrot.slane %v2923, 4
      %v2925 = vmax.f32 %v2923, %v2924
      %v2926 = vrot.slane %v2925, 2
      %v2927 = vmax.f32 %v2925, %v2926
      %v2928 = vrot.slane %v2927, 1
      %v2929 = vmax.f32 %v2927, %v2928
      %v2930 = vsel %vm2218, %v2929, 0.0
      %2931 = vadd.xlane.f32.xlu0 %v2930
      %v2932 = vpop.xlane.xlu0 %2931
      %v2933 = vmul.f32 %v2932, %v2818
      %v2934 = vsub.f32 %v2929, %v2933
      %v2935 = vmul.f32 %v2934, %v2934
      %v2936 = vsel %vm2218, %v2935, 0.0
      %2937 = vadd.xlane.f32.xlu0 %v2936
      %v2938 = vpop.xlane.xlu0 %2937
      %v2939 = vmul.f32 %v2938, %v2818
      %v2940 = vadd.f32 %v2939, 1e-05
      %v2941 = vrsqrt.pop %v2940
      %v2942 = vmul.f32 %v2941, %v2940
      %v2943 = vmul.f32 %v2942, %v2941
      %v2944 = vmul.f32 0.5, %v2943
      %v2945 = vsub.f32 1.5, %v2944
      %v2946 = vmul.f32 %v2941, %v2945
      %vm2947 = vweird.f32 %v2940
      %vm2948 = vweird.f32 %v2941
      %vm2949 = vmor %vm2947, %vm2948
      %v2950 = vsel %vm2949, %v2941, %v2946
      %v2951 = vmul.f32 %v2934, %v2950
      %v2952 = vmul.f32 %v2951, %v2805
      %v2953 = vadd.f32 %v2952, %v2806
      %v2954 = vmul.f32 %v2953, %v2807
      %vm2955 = vcmask 516096
      %v2956 = vsel %vm2955, %v2954, 0.0
      %2957 = vadd.xlane.f32.xlu0 %v2956
      %v2958 = vpop.xlane.xlu0 %2957
      %v2959 = vadd.f32 %v2958, %v2808
      %v2960 = vxor.u32 %v2959, 2147483648
      %v2961 = vmul.f32 %v2960, 1.442695
      %v2962 = vpow.pop %v2961
      %v2963 = vadd.f32 %v2962, 1.0
      %v2964 = vrcp.pop %v2963
      %v2965 = vmul.f32 %v2963, %v2964
      %v2966 = vsub.f32 1.0, %v2965
      %v2967 = vmul.f32 %v2964, %v2966
      %v2968 = vadd.f32 %v2964, %v2967
      %vm2969 = vweird.f32 %v2963
      %vm2970 = vweird.f32 %v2964
      %vm2971 = vmor %vm2969, %vm2970
      %v2972 = vsel %vm2971, %v2964, %v2968
      %v2973 = vand.u32 2147483647, %v2963
      %vm2974 = vcmp.eq.f32.partialorder %v2973, 8.507059e+37
      %v2975 = vand.u32 %v2963, 2147483648
      %v2976 = vor.u32 1.1754944e-38, %v2975
      %v2977 = vsel %vm2974, %v2976, %v2972
      %v2978 = vmul.f32 1.0, %v2977
      %2980 = vrot.lane.b32.xlu0 %v2978, 127
      %v2981 = vpop.permute.xlu0 %2980
      %vm2983 = vcmask 0
      %2984 = vst.msk [vmem:[#allocation3] sm:$0x1] %vm2983, %v2981
    $region17: #{simple_trans_forward.1} parent=1 // pred_fallthru
      _
    // Predicated region
    $region18: #{simple_trans_forward.1} parent=1 // pred_check
      _
    $region19: #{simple_trans_forward.1} parent=1 // pred_check_branch
      %2986 = sbr.rel (0) target = $region21
    $region20: #{simple_trans_forward.1} parent=1 // pred_region
      %2988 = vsyncadd [#allocation4], 0
      %s2990 = sshll.u32 [#allocation3], 4
      %s2991 = int_to_ptr.vmem [resolvable:$true] %s2990
      %s2992 = sshll.u32 %s3, 4
      %s2993 = int_to_ptr.hbm [resolvable:$true] %s2992
      %2995 = dma.vmem_to_hbm [thread:$0]  %s2991, 16, %s2993, [#allocation4]
    $region21: #{simple_trans_forward.1} parent=1 // pred_fallthru
      _
    // Predicated region
    $region22: #{simple_trans_forward.1} parent=1 // pred_check
      _
    $region23: #{simple_trans_forward.1} parent=1 // pred_check_branch
      %2997 = sbr.rel (0) target = $region25
    $region24: #{simple_trans_forward.1} parent=1 // pred_region
      %2999 = dma.done [#allocation4], 16
    $region25: #{simple_trans_forward.1} parent=1 // pred_fallthru
      _
    %3000 = vsyncpa [#allocation4], 1

</llo_original>
